<compile_context>
chip_gen: v7x
topology: tpu7x:2x2x1
jax: 0.10.0
libtpu: 0.0.40
codegen_flags: <defaults>
</compile_context>

<pallas_src>
import math

import jax
import jax.numpy as jnp
import numpy as np
from jax.experimental import pallas as pl
from jax.experimental.pallas import tpu as pltpu


# ----------------------------- configuration ------------------------------
NET_WIDTH = 32        # args.net_width
DEFOR_DEPTH = 2       # args.defor_depth: feature_out = Linear(.,W) + (D-1)x[ReLU, Linear(W,W)]
POSBASE_PE = 4        # args.posebase_pe
SCALE_ROT_PE = 4      # args.scale_rotation_pe
TIMEBASE_PE = 4       # args.timebase_pe (unused timenet)

HEAD_W = 4 * NET_WIDTH          # 128: four fused head hidden blocks
OUT_BLOCK = 32                  # fused head outputs, head i at sublane offset 8*i
HEAD_ORDER = (("pos", 3), ("scales", 3), ("rotations", 4), ("opacity", 1))

N_POINTS = 1024


# ------------------------------- parameters --------------------------------
def xavier_uniform(key, fan_in, fan_out):
    bound = math.sqrt(6.0 / (fan_in + fan_out))
    return jax.random.uniform(key, (fan_in, fan_out), jnp.float32, -bound, bound)


def init_params(key):
    """Parameter init matching the module's layer shapes (stored as (fan_in, fan_out))."""
    params = {"feature_out": [], "heads": {}}
    keys = iter(jax.random.split(key, 64))

    # feature_out: Linear(4, W), then (D-1) x [ReLU, Linear(W, W)]
    w = xavier_uniform(next(keys), 4, NET_WIDTH)
    b = jax.random.uniform(next(keys), (1, NET_WIDTH), jnp.float32, -0.1, 0.1)
    params["feature_out"].append((w, b))
    for _ in range(DEFOR_DEPTH - 1):
        w = xavier_uniform(next(keys), NET_WIDTH, NET_WIDTH)
        b = jax.random.uniform(next(keys), (1, NET_WIDTH), jnp.float32, -0.1, 0.1)
        params["feature_out"].append((w, b))

    # heads: ReLU, Linear(W,W), ReLU, Linear(W,out)
    for name, out_dim in HEAD_ORDER:
        w1 = xavier_uniform(next(keys), NET_WIDTH, NET_WIDTH)
        b1 = jax.random.uniform(next(keys), (1, NET_WIDTH), jnp.float32, -0.1, 0.1)
        w2 = xavier_uniform(next(keys), NET_WIDTH, out_dim)
        b2 = jax.random.uniform(next(keys), (1, out_dim), jnp.float32, -0.1, 0.1)
        params["heads"][name] = (w1, b1, w2, b2)

    # registered buffers (kept for the reference path / faithfulness)
    params["pos_poc"] = jnp.asarray([2.0 ** i for i in range(POSBASE_PE)], jnp.float32)
    params["rot_scale_poc"] = jnp.asarray([2.0 ** i for i in range(SCALE_ROT_PE)], jnp.float32)
    params["time_poc"] = jnp.asarray([2.0 ** i for i in range(TIMEBASE_PE)], jnp.float32)
    return params


def pack_params(params):
    """Pack all weights into feature-major (out, in) slabs.

    w0 : (W, 4)  f32   first Linear(4, W) (kept f32 for raw coordinates)
    wk : (W*(D-1) + 4W, W) bf16   hidden Linear(W,W) layers then fused head hidden
    wo : (32, 4W) bf16  fused head output layers, head i at rows [8i : 8i+out_dim],
                        columns [i*W : (i+1)*W]
    b  : (W*D + 4W + 32, 1) f32  all biases stacked as a feature-major column
    """
    W = NET_WIDTH
    D = len(params["feature_out"])
    HW = HEAD_W

    w0, b0 = params["feature_out"][0]
    w0_t = np.asarray(w0).T                                     # (W, 4)

    wk = np.zeros((W * (D - 1) + HW, W), np.float32)
    r = 0
    for l in range(1, D):
        wl, _ = params["feature_out"][l]
        wk[r:r + W, :] = np.asarray(wl).T
        r += W
    for i, (name, _) in enumerate(HEAD_ORDER):
        w1, _, _, _ = params["heads"][name]
        wk[r + i * W:r + (i + 1) * W, :] = np.asarray(w1).T
    r += HW
    assert r == wk.shape[0]

    wo = np.zeros((OUT_BLOCK, HW), np.float32)
    for i, (name, od) in enumerate(HEAD_ORDER):
        _, _, w2, _ = params["heads"][name]
        wo[8 * i:8 * i + od, i * W:(i + 1) * W] = np.asarray(w2).T

    nb = W * D + HW + OUT_BLOCK
    bias = np.zeros((nb, 1), np.float32)
    bias[0:W, 0] = np.asarray(b0)[0]
    off = W
    for l in range(1, D):
        _, bl = params["feature_out"][l]
        bias[off:off + W, 0] = np.asarray(bl)[0]
        off += W
    for i, (name, _) in enumerate(HEAD_ORDER):
        _, b1, _, _ = params["heads"][name]
        bias[off + i * W:off + (i + 1) * W, 0] = np.asarray(b1)[0]
    off += HW
    for i, (name, od) in enumerate(HEAD_ORDER):
        _, _, _, b2 = params["heads"][name]
        bias[off + 8 * i:off + 8 * i + od, 0] = np.asarray(b2)[0]
    off += OUT_BLOCK
    assert off == nb

    return {"w0": jnp.asarray(w0_t, jnp.float32),
            "wk": jnp.asarray(wk, jnp.bfloat16),
            "wo": jnp.asarray(wo, jnp.bfloat16),
            "b": jnp.asarray(bias, jnp.float32)}


# ------------------------------ Pallas kernel ------------------------------
def make_kernel(defor_depth):
    W = NET_WIDTH
    HW = HEAD_W

    def kernel(pt_ref, sc_ref, rt_ref, op_ref,          # data  (feature-major)
               w0_ref, wk_ref, wo_ref, b_ref,           # resident weights / biases
               pts_ref, sco_ref, rto_ref, opo_ref):     # outputs (feature-major)
        # All activations: (features, tile_n) f32, gaussians on the 128-lane axis.
        x4 = pt_ref[...]                                  # rows 0:3 point | row 3 time

        # --- feature_out layer 0: Linear(4, W), fully f32 (raw world coordinates).
        #     K=4 is tiny, so do it as 4 VPU FMAs instead of an MXU matmul.
        w0 = w0_ref[...]                                  # (W, 4) f32
        h = (b_ref[0:W, :]
             + w0[:, 0:1] * x4[0:1, :]
             + w0[:, 1:2] * x4[1:2, :]
             + w0[:, 2:3] * x4[2:3, :]
             + w0[:, 3:4] * x4[3:4, :])                   # (W, tile_n) f32

        # --- feature_out layers 1..D-1: ReLU -> Linear(W, W), bf16 matmul / f32 acc.
        r = 0
        for l in range(1, defor_depth):
            h = jnp.dot(wk_ref[r:r + W, :],
                        jnp.maximum(h, 0.0).astype(jnp.bfloat16),
                        preferred_element_type=jnp.float32) + b_ref[W * l:W * (l + 1), :]
            r += W

        # --- fused head hidden: four [ReLU, Linear(W, W)] stacked -> (4W, tile_n).
        boff = W * defor_depth
        t = jnp.dot(wk_ref[r:r + HW, :],
                    jnp.maximum(h, 0.0).astype(jnp.bfloat16),
                    preferred_element_type=jnp.float32) + b_ref[boff:boff + HW, :]
        boff += HW

        # --- fused head outputs: block layout (32, 4W); head i lives at sublane 8*i,
        #     so every slice below starts on an 8-aligned sublane offset.
        delta = jnp.dot(wo_ref[...],
                        jnp.maximum(t, 0.0).astype(jnp.bfloat16),
                        preferred_element_type=jnp.float32) + b_ref[boff:boff + OUT_BLOCK, :]

        # mask == 1 (static_mlp=False, empty_voxel=False): plain f32 residual adds.
        pts_ref[...] = x4[0:3, :] + delta[0:3, :]
        sco_ref[...] = sc_ref[...] + delta[8:11, :]
        rto_ref[...] = rt_ref[...] + delta[16:20, :]
        opo_ref[...] = op_ref[...] + delta[24:25, :]

    return kernel


# -------------------------------- wrapper ----------------------------------
def _pick_tile_n(n):
    """>=2 grid blocks when possible (v7x has 2 TensorCores); 256..4096 lanes, mult of 128."""
    half = -(-n // 2)
    t = ((half + 127) // 128) * 128
    return max(256, min(4096, t))


@jax.jit
def deform_network_gaussian_forward(packed, point, scales, rotations, opacity, times_sel):
    N = point.shape[0]
    W = NET_WIDTH
    D = (packed["wk"].shape[0] - HEAD_W) // W + 1     # static at trace time

    tile_n = _pick_tile_n(N)
    n_pad = -(-N // tile_n) * tile_n
    pad = n_pad - N
    grid = (n_pad // tile_n,)

    # Feature-major, lane-dense streams (layout plumbing only; XLA fuses these).
    # NOTE: the poc_fre sin/cos embeddings are intentionally not computed -- the
    # no_grid path only reads the raw leading columns (point_emb[:, :3] == point,
    # scales_emb[:, :3] == scales, ...), so the full embeddings are dead work.
    def fmaj(a, c):
        a = a[:, :c].astype(jnp.float32).T
        return jnp.pad(a, ((0, 0), (0, pad))) if pad else a

    pt_t = jnp.concatenate([fmaj(point, 3), fmaj(times_sel, 1)], axis=0)   # (4, n_pad)
    sc_t = fmaj(scales, 3)                                                 # (3, n_pad)
    rt_t = fmaj(rotations, 4)                                              # (4, n_pad)
    op_t = fmaj(opacity, 1)                                                # (1, n_pad)

    flops = 2 * n_pad * (4 * W + (D - 1) * W * W + W * HEAD_W + HEAD_W * OUT_BLOCK)
    bytes_accessed = (n_pad * (4 + 3 + 4 + 1 + 3 + 3 + 4 + 1) * 4
                      + packed["w0"].size * 4 + packed["wk"].size * 2
                      + packed["wo"].size * 2 + packed["b"].size * 4)

    def data_spec(c):
        return pl.BlockSpec((c, tile_n), lambda i: (0, i))

    def const_spec(a):
        return pl.BlockSpec(a.shape, lambda i: (0, 0))     # resident, never re-fetched

    pts_t, sco_t, rto_t, opo_t = pl.pallas_call(
        make_kernel(D),
        out_shape=(jax.ShapeDtypeStruct((3, n_pad), jnp.float32),
                   jax.ShapeDtypeStruct((3, n_pad), jnp.float32),
                   jax.ShapeDtypeStruct((4, n_pad), jnp.float32),
                   jax.ShapeDtypeStruct((1, n_pad), jnp.float32)),
        grid=grid,
        in_specs=[data_spec(4), data_spec(3), data_spec(4), data_spec(1),
                  const_spec(packed["w0"]), const_spec(packed["wk"]),
                  const_spec(packed["wo"]), const_spec(packed["b"])],
        out_specs=(data_spec(3), data_spec(3), data_spec(4), data_spec(1)),
        compiler_params=pltpu.CompilerParams(dimension_semantics=("parallel",)),
        cost_estimate=pl.CostEstimate(flops=flops, transcendentals=0,
                                      bytes_accessed=bytes_accessed),
    )(pt_t, sc_t, rt_t, op_t, packed["w0"], packed["wk"], packed["wo"], packed["b"])

    # Padded lanes hold bias-driven garbage -- the [:, :N] slices must stay.
    pts = pts_t[:, :N].T
    new_scales = sco_t[:, :N].T
    new_rotations = rto_t[:, :N].T
    new_opacity = opo_t[:, :N].T
    shs = None   # module always returns shs=None from forward_dynamic
    return pts, new_scales, new_rotations, new_opacity, shs


# ----------------------------- pure-JAX reference ---------------------------
def reference_forward(params, point, scales, rotations, opacity, times_sel):
    """Literal f32 transcription of the torch forward_dynamic (no_grid path)."""
    def poc_fre(x, poc):
        emb = (x[..., None] * poc).reshape(x.shape[:-1] + (-1,))
        return jnp.concatenate([x, jnp.sin(emb), jnp.cos(emb)], axis=-1)

    point_emb = poc_fre(point, params["pos_poc"])
    scales_emb = poc_fre(scales, params["rot_scale_poc"])
    rotations_emb = poc_fre(rotations, params["rot_scale_poc"])

    h = jnp.concatenate([point_emb[:, :3], times_sel[:, :1]], axis=-1)
    w, b = params["feature_out"][0]
    h = h @ w + b
    for (w, b) in params["feature_out"][1:]:
        h = jnp.maximum(h, 0.0) @ w + b

    def head(name):
        w1, b1, w2, b2 = params["heads"][name]
        t = jnp.maximum(h, 0.0) @ w1 + b1
        return jnp.maximum(t, 0.0) @ w2 + b2

    mask = jnp.ones_like(opacity[:, :1])
    pts = point_emb[:, :3] * mask + head("pos")
    sc = scales_emb[:, :3] * mask + head("scales")
    rot = rotations_emb[:, :4] + head("rotations")
    op = opacity[:, :1] * mask + head("opacity")
    return pts, sc, rot, op, None


# --------------------------------- main -------------------------------------
if __name__ == "__main__":
    key = jax.random.PRNGKey(0)
    k_param, k_pt, k_sc, k_rot, k_op, k_t = jax.random.split(key, 6)

    params = init_params(k_param)
    packed = pack_params(params)

    point = jax.random.normal(k_pt, (N_POINTS, 3), jnp.float32)
    scales = jax.random.normal(k_sc, (N_POINTS, 3), jnp.float32)
    rotations = jax.random.normal(k_rot, (N_POINTS, 4), jnp.float32)
    opacity = jax.random.uniform(k_op, (N_POINTS, 1), jnp.float32)
    times_sel = jax.random.uniform(k_t, (N_POINTS, 1), jnp.float32)

    pts, new_scales, new_rotations, new_opacity, shs = deform_network_gaussian_forward(
        packed, point, scales, rotations, opacity, times_sel)
    jax.block_until_ready((pts, new_scales, new_rotations, new_opacity))

    assert pts.shape == (N_POINTS, 3)
    assert new_scales.shape == (N_POINTS, 3)
    assert new_rotations.shape == (N_POINTS, 4)
    assert new_opacity.shape == (N_POINTS, 1)
    assert shs is None

    # hidden layers run with bf16 weights/activations (f32 accum); first layer is f32.
    r_pts, r_sc, r_rot, r_op, _ = reference_forward(
        params, point, scales, rotations, opacity, times_sel)
    for got, ref in ((pts, r_pts), (new_scales, r_sc),
                     (new_rotations, r_rot), (new_opacity, r_op)):
        np.testing.assert_allclose(np.asarray(got), np.asarray(ref),
                                   rtol=5e-2, atol=5e-2)

    print("KERNEL_OK")
</pallas_src>

<mosaic_0001>
module attributes {stable_mosaic.version = 11 : i64} {
  func.func @kernel(%arg0: i32, %arg1: memref<4x512xf32, #tpu.memory_space<vmem>>, %arg2: memref<3x512xf32, #tpu.memory_space<vmem>>, %arg3: memref<4x512xf32, #tpu.memory_space<vmem>>, %arg4: memref<1x512xf32, #tpu.memory_space<vmem>>, %arg5: memref<32x4xf32, #tpu.memory_space<vmem>>, %arg6: memref<160x32xbf16, #tpu.memory_space<vmem>>, %arg7: memref<32x128xbf16, #tpu.memory_space<vmem>>, %arg8: memref<224x1xf32, #tpu.memory_space<vmem>>, %arg9: memref<3x512xf32, #tpu.memory_space<vmem>>, %arg10: memref<3x512xf32, #tpu.memory_space<vmem>>, %arg11: memref<4x512xf32, #tpu.memory_space<vmem>>, %arg12: memref<1x512xf32, #tpu.memory_space<vmem>>) attributes {dimension_semantics = [#tpu.dimension_semantics<parallel>], iteration_bounds = array<i64: 2>, scalar_prefetch = 0 : i64, scratch_operands = 0 : i64, tpu.core_type = #tpu.core_type<tc>, window_params = [{transform_indices = @transform_0, window_bounds = array<i64: 4, 512>}, {transform_indices = @transform_1, window_bounds = array<i64: 3, 512>}, {transform_indices = @transform_2, window_bounds = array<i64: 4, 512>}, {transform_indices = @transform_3, window_bounds = array<i64: 1, 512>}, {pipeline_mode = #tpu.pipeline_mode<synchronous>, transform_indices = @transform_4, window_bounds = array<i64: 32, 4>}, {pipeline_mode = #tpu.pipeline_mode<synchronous>, transform_indices = @transform_5, window_bounds = array<i64: 160, 32>}, {pipeline_mode = #tpu.pipeline_mode<synchronous>, transform_indices = @transform_6, window_bounds = array<i64: 32, 128>}, {pipeline_mode = #tpu.pipeline_mode<synchronous>, transform_indices = @transform_7, window_bounds = array<i64: 224, 1>}, {transform_indices = @transform_8, window_bounds = array<i64: 3, 512>}, {transform_indices = @transform_9, window_bounds = array<i64: 3, 512>}, {transform_indices = @transform_10, window_bounds = array<i64: 4, 512>}, {transform_indices = @transform_11, window_bounds = array<i64: 1, 512>}]} {
    %c0 = arith.constant 0 : index
    %c0_0 = arith.constant 0 : index
    %0 = vector.load %arg1[%c0, %c0_0] : memref<4x512xf32, #tpu.memory_space<vmem>>, vector<4x512xf32>
    %c0_1 = arith.constant 0 : index
    %c0_2 = arith.constant 0 : index
    %1 = vector.load %arg5[%c0_1, %c0_2] : memref<32x4xf32, #tpu.memory_space<vmem>>, vector<32x4xf32>
    %c0_3 = arith.constant 0 : index
    %c0_4 = arith.constant 0 : index
    %2 = vector.load %arg8[%c0_3, %c0_4] : memref<224x1xf32, #tpu.memory_space<vmem>>, vector<32x1xf32>
    %3 = vector.extract_strided_slice %1 {offsets = [0, 0], sizes = [32, 1], strides = [1, 1]} : vector<32x4xf32> to vector<32x1xf32>
    %4 = vector.extract_strided_slice %0 {offsets = [0, 0], sizes = [1, 512], strides = [1, 1]} : vector<4x512xf32> to vector<1x512xf32>
    %5 = vector.broadcast %3 : vector<32x1xf32> to vector<32x512xf32>
    %6 = vector.broadcast %4 : vector<1x512xf32> to vector<32x512xf32>
    %7 = arith.mulf %5, %6 : vector<32x512xf32>
    %8 = vector.broadcast %2 : vector<32x1xf32> to vector<32x512xf32>
    %9 = arith.addf %8, %7 : vector<32x512xf32>
    %10 = vector.extract_strided_slice %1 {offsets = [0, 1], sizes = [32, 1], strides = [1, 1]} : vector<32x4xf32> to vector<32x1xf32>
    %11 = vector.extract_strided_slice %0 {offsets = [1, 0], sizes = [1, 512], strides = [1, 1]} : vector<4x512xf32> to vector<1x512xf32>
    %12 = vector.broadcast %10 : vector<32x1xf32> to vector<32x512xf32>
    %13 = vector.broadcast %11 : vector<1x512xf32> to vector<32x512xf32>
    %14 = arith.mulf %12, %13 : vector<32x512xf32>
    %15 = arith.addf %9, %14 : vector<32x512xf32>
    %16 = vector.extract_strided_slice %1 {offsets = [0, 2], sizes = [32, 1], strides = [1, 1]} : vector<32x4xf32> to vector<32x1xf32>
    %17 = vector.extract_strided_slice %0 {offsets = [2, 0], sizes = [1, 512], strides = [1, 1]} : vector<4x512xf32> to vector<1x512xf32>
    %18 = vector.broadcast %16 : vector<32x1xf32> to vector<32x512xf32>
    %19 = vector.broadcast %17 : vector<1x512xf32> to vector<32x512xf32>
    %20 = arith.mulf %18, %19 : vector<32x512xf32>
    %21 = arith.addf %15, %20 : vector<32x512xf32>
    %22 = vector.extract_strided_slice %1 {offsets = [0, 3], sizes = [32, 1], strides = [1, 1]} : vector<32x4xf32> to vector<32x1xf32>
    %23 = vector.extract_strided_slice %0 {offsets = [3, 0], sizes = [1, 512], strides = [1, 1]} : vector<4x512xf32> to vector<1x512xf32>
    %24 = vector.broadcast %22 : vector<32x1xf32> to vector<32x512xf32>
    %25 = vector.broadcast %23 : vector<1x512xf32> to vector<32x512xf32>
    %26 = arith.mulf %24, %25 : vector<32x512xf32>
    %27 = arith.addf %21, %26 : vector<32x512xf32>
    %c0_5 = arith.constant 0 : index
    %c0_6 = arith.constant 0 : index
    %28 = vector.load %arg6[%c0_5, %c0_6] : memref<160x32xbf16, #tpu.memory_space<vmem>>, vector<32x32xbf16>
    %cst = arith.constant 0.000000e+00 : f32
    %29 = vector.broadcast %cst : f32 to vector<32x512xf32>
    %30 = arith.maximumf %27, %29 : vector<32x512xf32>
    %31 = arith.truncf %30 : vector<32x512xf32> to vector<32x512xbf16>
    %cst_7 = arith.constant dense<0.000000e+00> : vector<32x512xf32>
    %32 = tpu.matmul %28, %31, %cst_7 {dimension_numbers = #tpu.dot_dimension_numbers<[1], [0], [0], [1], [0, 0, 1, 1], [], []>} : vector<32x32xbf16>, vector<32x512xbf16>, vector<32x512xf32> -> vector<32x512xf32>
    %c32 = arith.constant 32 : index
    %c0_8 = arith.constant 0 : index
    %33 = vector.load %arg8[%c32, %c0_8] : memref<224x1xf32, #tpu.memory_space<vmem>>, vector<32x1xf32>
    %34 = vector.broadcast %33 : vector<32x1xf32> to vector<32x512xf32>
    %35 = arith.addf %32, %34 : vector<32x512xf32>
    %c32_9 = arith.constant 32 : index
    %c0_10 = arith.constant 0 : index
    %36 = vector.load %arg6[%c32_9, %c0_10] : memref<160x32xbf16, #tpu.memory_space<vmem>>, vector<128x32xbf16>
    %cst_11 = arith.constant 0.000000e+00 : f32
    %37 = vector.broadcast %cst_11 : f32 to vector<32x512xf32>
    %38 = arith.maximumf %35, %37 : vector<32x512xf32>
    %39 = arith.truncf %38 : vector<32x512xf32> to vector<32x512xbf16>
    %cst_12 = arith.constant dense<0.000000e+00> : vector<128x512xf32>
    %40 = tpu.matmul %36, %39, %cst_12 {dimension_numbers = #tpu.dot_dimension_numbers<[1], [0], [0], [1], [0, 0, 1, 1], [], []>} : vector<128x32xbf16>, vector<32x512xbf16>, vector<128x512xf32> -> vector<128x512xf32>
    %c64 = arith.constant 64 : index
    %c0_13 = arith.constant 0 : index
    %41 = vector.load %arg8[%c64, %c0_13] : memref<224x1xf32, #tpu.memory_space<vmem>>, vector<128x1xf32>
    %42 = vector.broadcast %41 : vector<128x1xf32> to vector<128x512xf32>
    %43 = arith.addf %40, %42 : vector<128x512xf32>
    %c0_14 = arith.constant 0 : index
    %c0_15 = arith.constant 0 : index
    %44 = vector.load %arg7[%c0_14, %c0_15] : memref<32x128xbf16, #tpu.memory_space<vmem>>, vector<32x128xbf16>
    %cst_16 = arith.constant 0.000000e+00 : f32
    %45 = vector.broadcast %cst_16 : f32 to vector<128x512xf32>
    %46 = arith.maximumf %43, %45 : vector<128x512xf32>
    %47 = arith.truncf %46 : vector<128x512xf32> to vector<128x512xbf16>
    %cst_17 = arith.constant dense<0.000000e+00> : vector<32x512xf32>
    %48 = tpu.matmul %44, %47, %cst_17 {dimension_numbers = #tpu.dot_dimension_numbers<[1], [0], [0], [1], [0, 0, 1, 1], [], []>} : vector<32x128xbf16>, vector<128x512xbf16>, vector<32x512xf32> -> vector<32x512xf32>
    %c192 = arith.constant 192 : index
    %c0_18 = arith.constant 0 : index
    %49 = vector.load %arg8[%c192, %c0_18] : memref<224x1xf32, #tpu.memory_space<vmem>>, vector<32x1xf32>
    %50 = vector.broadcast %49 : vector<32x1xf32> to vector<32x512xf32>
    %51 = arith.addf %48, %50 : vector<32x512xf32>
    %52 = vector.extract_strided_slice %0 {offsets = [0, 0], sizes = [3, 512], strides = [1, 1]} : vector<4x512xf32> to vector<3x512xf32>
    %53 = vector.extract_strided_slice %51 {offsets = [0, 0], sizes = [3, 512], strides = [1, 1]} : vector<32x512xf32> to vector<3x512xf32>
    %54 = arith.addf %52, %53 : vector<3x512xf32>
    %c0_19 = arith.constant 0 : index
    %c0_20 = arith.constant 0 : index
    %55 = vector.load %arg9[%c0_19, %c0_20] : memref<3x512xf32, #tpu.memory_space<vmem>>, vector<3x512xf32>
    tpu.vector_store %arg9[%c0_19, %c0_20], %54 {strides = array<i32>} : memref<3x512xf32, #tpu.memory_space<vmem>>, vector<3x512xf32>,
    %c0_21 = arith.constant 0 : index
    %c0_22 = arith.constant 0 : index
    %56 = vector.load %arg2[%c0_21, %c0_22] : memref<3x512xf32, #tpu.memory_space<vmem>>, vector<3x512xf32>
    %57 = vector.extract_strided_slice %51 {offsets = [8, 0], sizes = [3, 512], strides = [1, 1]} : vector<32x512xf32> to vector<3x512xf32>
    %58 = arith.addf %56, %57 : vector<3x512xf32>
    %c0_23 = arith.constant 0 : index
    %c0_24 = arith.constant 0 : index
    %59 = vector.load %arg10[%c0_23, %c0_24] : memref<3x512xf32, #tpu.memory_space<vmem>>, vector<3x512xf32>
    tpu.vector_store %arg10[%c0_23, %c0_24], %58 {strides = array<i32>} : memref<3x512xf32, #tpu.memory_space<vmem>>, vector<3x512xf32>,
    %c0_25 = arith.constant 0 : index
    %c0_26 = arith.constant 0 : index
    %60 = vector.load %arg3[%c0_25, %c0_26] : memref<4x512xf32, #tpu.memory_space<vmem>>, vector<4x512xf32>
    %61 = vector.extract_strided_slice %51 {offsets = [16, 0], sizes = [4, 512], strides = [1, 1]} : vector<32x512xf32> to vector<4x512xf32>
    %62 = arith.addf %60, %61 : vector<4x512xf32>
    %c0_27 = arith.constant 0 : index
    %c0_28 = arith.constant 0 : index
    %63 = vector.load %arg11[%c0_27, %c0_28] : memref<4x512xf32, #tpu.memory_space<vmem>>, vector<4x512xf32>
    tpu.vector_store %arg11[%c0_27, %c0_28], %62 {strides = array<i32>} : memref<4x512xf32, #tpu.memory_space<vmem>>, vector<4x512xf32>,
    %c0_29 = arith.constant 0 : index
    %c0_30 = arith.constant 0 : index
    %64 = vector.load %arg4[%c0_29, %c0_30] : memref<1x512xf32, #tpu.memory_space<vmem>>, vector<1x512xf32>
    %65 = vector.extract_strided_slice %51 {offsets = [24, 0], sizes = [1, 512], strides = [1, 1]} : vector<32x512xf32> to vector<1x512xf32>
    %66 = arith.addf %64, %65 : vector<1x512xf32>
    %c0_31 = arith.constant 0 : index
    %c0_32 = arith.constant 0 : index
    %67 = vector.load %arg12[%c0_31, %c0_32] : memref<1x512xf32, #tpu.memory_space<vmem>>, vector<1x512xf32>
    tpu.vector_store %arg12[%c0_31, %c0_32], %66 {strides = array<i32>} : memref<1x512xf32, #tpu.memory_space<vmem>>, vector<1x512xf32>,
    return
  }
  func.func @transform_0(%arg0: i32) -> (i32, i32) {
    %c0_i32 = arith.constant 0 : i32
    %c0_i32_0 = arith.constant 0 : i32
    return %c0_i32, %arg0 : i32, i32
  }
  func.func @transform_1(%arg0: i32) -> (i32, i32) {
    %c0_i32 = arith.constant 0 : i32
    %c0_i32_0 = arith.constant 0 : i32
    return %c0_i32, %arg0 : i32, i32
  }
  func.func @transform_2(%arg0: i32) -> (i32, i32) {
    %c0_i32 = arith.constant 0 : i32
    %c0_i32_0 = arith.constant 0 : i32
    return %c0_i32, %arg0 : i32, i32
  }
  func.func @transform_3(%arg0: i32) -> (i32, i32) {
    %c0_i32 = arith.constant 0 : i32
    %c0_i32_0 = arith.constant 0 : i32
    return %c0_i32, %arg0 : i32, i32
  }
  func.func @transform_4(%arg0: i32) -> (i32, i32) {
    %c0_i32 = arith.constant 0 : i32
    %c0_i32_0 = arith.constant 0 : i32
    %c0_i32_1 = arith.constant 0 : i32
    return %c0_i32, %c0_i32_0 : i32, i32
  }
  func.func @transform_5(%arg0: i32) -> (i32, i32) {
    %c0_i32 = arith.constant 0 : i32
    %c0_i32_0 = arith.constant 0 : i32
    %c0_i32_1 = arith.constant 0 : i32
    return %c0_i32, %c0_i32_0 : i32, i32
  }
  func.func @transform_6(%arg0: i32) -> (i32, i32) {
    %c0_i32 = arith.constant 0 : i32
    %c0_i32_0 = arith.constant 0 : i32
    %c0_i32_1 = arith.constant 0 : i32
    return %c0_i32, %c0_i32_0 : i32, i32
  }
  func.func @transform_7(%arg0: i32) -> (i32, i32) {
    %c0_i32 = arith.constant 0 : i32
    %c0_i32_0 = arith.constant 0 : i32
    %c0_i32_1 = arith.constant 0 : i32
    return %c0_i32, %c0_i32_0 : i32, i32
  }
  func.func @transform_8(%arg0: i32) -> (i32, i32) {
    %c0_i32 = arith.constant 0 : i32
    %c0_i32_0 = arith.constant 0 : i32
    return %c0_i32, %arg0 : i32, i32
  }
  func.func @transform_9(%arg0: i32) -> (i32, i32) {
    %c0_i32 = arith.constant 0 : i32
    %c0_i32_0 = arith.constant 0 : i32
    return %c0_i32, %arg0 : i32, i32
  }
  func.func @transform_10(%arg0: i32) -> (i32, i32) {
    %c0_i32 = arith.constant 0 : i32
    %c0_i32_0 = arith.constant 0 : i32
    return %c0_i32, %arg0 : i32, i32
  }
  func.func @transform_11(%arg0: i32) -> (i32, i32) {
    %c0_i32 = arith.constant 0 : i32
    %c0_i32_0 = arith.constant 0 : i32
    return %c0_i32, %arg0 : i32, i32
  }
}

</mosaic_0001>

<llo_original>
// kernel: deform_network_gaussian_forward.1
$region0: #{deform_network_gaussian_forward.1}
  #allocation0 [shape = 'u32[]', space=smem, size = 0x4, offset = 0x4, fixed_abs, tag = 'smem constant byte address 0x4 - core index']
  #allocation1 [shape = 'u32[144,128]{1,0:T(1,128)}', space=vmem, size = 0x12000, scoped, tag = 'internal scratch']
  %s0 = inlined_call_operand.vmem [shape: f32[4,1024], index: 0, kind: input, shape index: {}]
  %s1 = inlined_call_operand.vmem [shape: f32[3,1024], index: 1, kind: input, shape index: {}]
  %s2 = inlined_call_operand.vmem [shape: f32[4,1024], index: 2, kind: input, shape index: {}]
  %s3 = inlined_call_operand.vmem [shape: f32[1,1024], index: 3, kind: input, shape index: {}]
  %s4 = inlined_call_operand.vmem [shape: f32[32,4], index: 4, kind: input, shape index: {}]
  %s5 = inlined_call_operand.vmem [shape: bf16[160,32], index: 5, kind: input, shape index: {}]
  %s6 = inlined_call_operand.vmem [shape: bf16[32,128], index: 6, kind: input, shape index: {}]
  %s7 = inlined_call_operand.vmem [shape: f32[224,1], index: 7, kind: input, shape index: {}]
  %s8 = inlined_call_operand.hbm [shape: f32[3,1024], index: 8, kind: output, shape index: {0}]
  %s9 = inlined_call_operand.hbm [shape: f32[3,1024], index: 9, kind: output, shape index: {1}]
  %s10 = inlined_call_operand.hbm [shape: f32[4,1024], index: 10, kind: output, shape index: {2}]
  %s11 = inlined_call_operand.hbm [shape: f32[1,1024], index: 11, kind: output, shape index: {3}]
  %12 = xla_tuple %s8, %s9, %s10, %s11
  %s13 = sld [smem:[#allocation0]]
  $region89: #{deform_network_gaussian_forward.1} parent=0
    _
  %s15 = ssub.s32 1, %s13
  %s16 = scalar_select 0, %s15, %s13
  $region1: #{deform_network_gaussian_forward.1} parent=0
    #allocation2 [shape = 'u8[16384]{0}', space=vmem, size = 0x4000, scoped, tag = 'output window, operand 0']
    #allocation3 [shape = 's32[2]{0}', space=sflag, size = 0x8, scoped, tag = 'scoped memory for deform_network_gaussian_forward.1']
    #allocation4 [shape = 'u8[16384]{0}', space=vmem, size = 0x4000, scoped, tag = 'output window, operand 1']
    #allocation5 [shape = 's32[2]{0}', space=sflag, size = 0x8, scoped, tag = 'scoped memory for deform_network_gaussian_forward.1']
    #allocation6 [shape = 'u8[16384]{0}', space=vmem, size = 0x4000, scoped, tag = 'output window, operand 2']
    #allocation7 [shape = 'u8[4096]{0}', space=vmem, size = 0x1000, scoped, tag = 'output window, operand 3']
    #allocation8 [shape = 's32[2]{0}', space=sflag, size = 0x8, scoped, tag = 'scoped memory for deform_network_gaussian_forward.1']
    %17 = vsyncpa [#allocation3], 0
    %s18 = scalar_lea.sflag [#allocation3], 1
    %19 = vsyncpa %s18, 0
    %20 = vsyncpa [#allocation5], 0
    %s21 = scalar_lea.sflag [#allocation5], 1
    %22 = vsyncpa %s21, 0
    %23 = vsyncpa [#allocation8], 0
    %s24 = scalar_lea.sflag [#allocation8], 1
    %25 = vsyncpa %s24, 0
    loop: start=0, step=1, limit=4
    $region2: #{deform_network_gaussian_forward.1} parent=1 // loop_pre_header
      _
    $region3: #{deform_network_gaussian_forward.1} parent=1 // loop_header
      %s27 = sphi 0, %s31
      %p28 = scmp.ge.s32.totalorder %s27, 4
      %s37 = sphi 0, %s39
      %s40 = sphi 0, %s37
      %s41 = sphi 0, %s40
      %s57 = sphi 0, %s41
      %s63 = sphi 0, %s65
      %s66 = sphi 0, %s63
      %s67 = sphi 0, %s66
      %s83 = sphi 0, %s67
      %s89 = sphi 0, %s91
      %s92 = sphi 0, %s89
      %s93 = sphi 0, %s92
      %s109 = sphi 0, %s93
      %s115 = sphi 0, %s117
      %s118 = sphi 0, %s115
      %s119 = sphi 0, %s118
      %s135 = sphi 0, %s119
      %s139 = sphi 0, %s139
      %s141 = sphi 0, %s139
      %s142 = sphi 0, %s141
      %s156 = sphi 0, %s142
      %s160 = sphi 0, %s160
      %s162 = sphi 0, %s160
      %s163 = sphi 0, %s162
      %s177 = sphi 0, %s163
      %s181 = sphi 0, %s181
      %s183 = sphi 0, %s181
      %s184 = sphi 0, %s183
      %s198 = sphi 0, %s184
      %s202 = sphi 0, %s202
      %s204 = sphi 0, %s202
      %s205 = sphi 0, %s204
      %s219 = sphi 0, %s205
      %s225 = sphi 0, %s227
      %s228 = sphi 0, %s225
      %s229 = sphi 0, %s228
      %s245 = sphi 0, %s229
      %s251 = sphi 0, %s253
      %s254 = sphi 0, %s251
      %s255 = sphi 0, %s254
      %s271 = sphi 0, %s255
      %s277 = sphi 0, %s279
      %s280 = sphi 0, %s277
      %s281 = sphi 0, %s280
      %s297 = sphi 0, %s281
      %s303 = sphi 0, %s305
      %s306 = sphi 0, %s303
      %s307 = sphi 0, %s306
      %s323 = sphi 0, %s307
    $region4: #{deform_network_gaussian_forward.1} parent=1 // loop_header_branch
      %30 = sbr.rel (%p28) target = $region8
    $region5: #{deform_network_gaussian_forward.1} parent=1 // loop_body
      %s32 = ssub.s32 %s27, 1
      %s33 = ssub.s32 %s27, 2
      %s34 = sadd.s32 %s27, 1
      %s35 = ssub.s32 %s27, %s34
      %p36 = scmp.eq.s32.totalorder %s35, 0
      %s38 = sadd.s32 %s37, 1
      %s39 = scalar_select %p36, %s37, %s38
      %p42 = pneg %p36
      %p43 = scmp.eq.s32.totalorder %s27, 1
      %p44 = por %p42, %p43
      %p45 = scmp.ne.s32.totalorder %s37, %s40
      %p46 = scmp.eq.s32.totalorder %s27, 0
      %p47 = por %p45, %p46
      %p48 = scmp.ne.s32.totalorder %s37, %s40
      %p49 = scmp.eq.s32.totalorder %s32, 1
      %p50 = por %p48, %p49
      %p51 = scmp.ne.s32.totalorder %s40, %s41
      %p52 = scmp.eq.s32.totalorder %s32, 0
      %p53 = por %p51, %p52
      %p54 = scmp.ne.s32.totalorder %s40, %s41
      %p55 = scmp.eq.s32.totalorder %s33, 1
      %p56 = por %p54, %p55
      %p58 = scmp.ne.s32.totalorder %s41, %s57
      %p59 = scmp.eq.s32.totalorder %s33, 0
      %p60 = por %p58, %p59
      %s61 = ssub.s32 %s27, %s34
      %p62 = scmp.eq.s32.totalorder %s61, 0
      %s64 = sadd.s32 %s63, 1
      %s65 = scalar_select %p62, %s63, %s64
      %p68 = pneg %p62
      %p69 = scmp.eq.s32.totalorder %s27, 1
      %p70 = por %p68, %p69
      %p71 = scmp.ne.s32.totalorder %s63, %s66
      %p72 = scmp.eq.s32.totalorder %s27, 0
      %p73 = por %p71, %p72
      %p74 = scmp.ne.s32.totalorder %s63, %s66
      %p75 = scmp.eq.s32.totalorder %s32, 1
      %p76 = por %p74, %p75
      %p77 = scmp.ne.s32.totalorder %s66, %s67
      %p78 = scmp.eq.s32.totalorder %s32, 0
      %p79 = por %p77, %p78
      %p80 = scmp.ne.s32.totalorder %s66, %s67
      %p81 = scmp.eq.s32.totalorder %s33, 1
      %p82 = por %p80, %p81
      %p84 = scmp.ne.s32.totalorder %s67, %s83
      %p85 = scmp.eq.s32.totalorder %s33, 0
      %p86 = por %p84, %p85
      %s87 = ssub.s32 %s27, %s34
      %p88 = scmp.eq.s32.totalorder %s87, 0
      %s90 = sadd.s32 %s89, 1
      %s91 = scalar_select %p88, %s89, %s90
      %p94 = pneg %p88
      %p95 = scmp.eq.s32.totalorder %s27, 1
      %p96 = por %p94, %p95
      %p97 = scmp.ne.s32.totalorder %s89, %s92
      %p98 = scmp.eq.s32.totalorder %s27, 0
      %p99 = por %p97, %p98
      %p100 = scmp.ne.s32.totalorder %s89, %s92
      %p101 = scmp.eq.s32.totalorder %s32, 1
      %p102 = por %p100, %p101
      %p103 = scmp.ne.s32.totalorder %s92, %s93
      %p104 = scmp.eq.s32.totalorder %s32, 0
      %p105 = por %p103, %p104
      %p106 = scmp.ne.s32.totalorder %s92, %s93
      %p107 = scmp.eq.s32.totalorder %s33, 1
      %p108 = por %p106, %p107
      %p110 = scmp.ne.s32.totalorder %s93, %s109
      %p111 = scmp.eq.s32.totalorder %s33, 0
      %p112 = por %p110, %p111
      %s113 = ssub.s32 %s27, %s34
      %p114 = scmp.eq.s32.totalorder %s113, 0
      %s116 = sadd.s32 %s115, 1
      %s117 = scalar_select %p114, %s115, %s116
      %p120 = pneg %p114
      %p121 = scmp.eq.s32.totalorder %s27, 1
      %p122 = por %p120, %p121
      %p123 = scmp.ne.s32.totalorder %s115, %s118
      %p124 = scmp.eq.s32.totalorder %s27, 0
      %p125 = por %p123, %p124
      %p126 = scmp.ne.s32.totalorder %s115, %s118
      %p127 = scmp.eq.s32.totalorder %s32, 1
      %p128 = por %p126, %p127
      %p129 = scmp.ne.s32.totalorder %s118, %s119
      %p130 = scmp.eq.s32.totalorder %s32, 0
      %p131 = por %p129, %p130
      %p132 = scmp.ne.s32.totalorder %s118, %s119
      %p133 = scmp.eq.s32.totalorder %s33, 1
      %p134 = por %p132, %p133
      %p136 = scmp.ne.s32.totalorder %s119, %s135
      %p137 = scmp.eq.s32.totalorder %s33, 0
      %p138 = por %p136, %p137
      %s140 = sadd.s32 %s139, 1
      %p143 = scmp.eq.s32.totalorder %s27, 1
      %p144 = scmp.ne.s32.totalorder %s139, %s141
      %p145 = scmp.eq.s32.totalorder %s27, 0
      %p146 = por %p144, %p145
      %p147 = scmp.ne.s32.totalorder %s139, %s141
      %p148 = scmp.eq.s32.totalorder %s32, 1
      %p149 = por %p147, %p148
      %p150 = scmp.ne.s32.totalorder %s141, %s142
      %p151 = scmp.eq.s32.totalorder %s32, 0
      %p152 = por %p150, %p151
      %p153 = scmp.ne.s32.totalorder %s141, %s142
      %p154 = scmp.eq.s32.totalorder %s33, 1
      %p155 = por %p153, %p154
      %p157 = scmp.ne.s32.totalorder %s142, %s156
      %p158 = scmp.eq.s32.totalorder %s33, 0
      %p159 = por %p157, %p158
      %s161 = sadd.s32 %s160, 1
      %p164 = scmp.eq.s32.totalorder %s27, 1
      %p165 = scmp.ne.s32.totalorder %s160, %s162
      %p166 = scmp.eq.s32.totalorder %s27, 0
      %p167 = por %p165, %p166
      %p168 = scmp.ne.s32.totalorder %s160, %s162
      %p169 = scmp.eq.s32.totalorder %s32, 1
      %p170 = por %p168, %p169
      %p171 = scmp.ne.s32.totalorder %s162, %s163
      %p172 = scmp.eq.s32.totalorder %s32, 0
      %p173 = por %p171, %p172
      %p174 = scmp.ne.s32.totalorder %s162, %s163
      %p175 = scmp.eq.s32.totalorder %s33, 1
      %p176 = por %p174, %p175
      %p178 = scmp.ne.s32.totalorder %s163, %s177
      %p179 = scmp.eq.s32.totalorder %s33, 0
      %p180 = por %p178, %p179
      %s182 = sadd.s32 %s181, 1
      %p185 = scmp.eq.s32.totalorder %s27, 1
      %p186 = scmp.ne.s32.totalorder %s181, %s183
      %p187 = scmp.eq.s32.totalorder %s27, 0
      %p188 = por %p186, %p187
      %p189 = scmp.ne.s32.totalorder %s181, %s183
      %p190 = scmp.eq.s32.totalorder %s32, 1
      %p191 = por %p189, %p190
      %p192 = scmp.ne.s32.totalorder %s183, %s184
      %p193 = scmp.eq.s32.totalorder %s32, 0
      %p194 = por %p192, %p193
      %p195 = scmp.ne.s32.totalorder %s183, %s184
      %p196 = scmp.eq.s32.totalorder %s33, 1
      %p197 = por %p195, %p196
      %p199 = scmp.ne.s32.totalorder %s184, %s198
      %p200 = scmp.eq.s32.totalorder %s33, 0
      %p201 = por %p199, %p200
      %s203 = sadd.s32 %s202, 1
      %p206 = scmp.eq.s32.totalorder %s27, 1
      %p207 = scmp.ne.s32.totalorder %s202, %s204
      %p208 = scmp.eq.s32.totalorder %s27, 0
      %p209 = por %p207, %p208
      %p210 = scmp.ne.s32.totalorder %s202, %s204
      %p211 = scmp.eq.s32.totalorder %s32, 1
      %p212 = por %p210, %p211
      %p213 = scmp.ne.s32.totalorder %s204, %s205
      %p214 = scmp.eq.s32.totalorder %s32, 0
      %p215 = por %p213, %p214
      %p216 = scmp.ne.s32.totalorder %s204, %s205
      %p217 = scmp.eq.s32.totalorder %s33, 1
      %p218 = por %p216, %p217
      %p220 = scmp.ne.s32.totalorder %s205, %s219
      %p221 = scmp.eq.s32.totalorder %s33, 0
      %p222 = por %p220, %p221
      %s223 = ssub.s32 %s27, %s34
      %p224 = scmp.eq.s32.totalorder %s223, 0
      %s226 = sadd.s32 %s225, 1
      %s227 = scalar_select %p224, %s225, %s226
      %p230 = pneg %p224
      %p231 = scmp.eq.s32.totalorder %s27, 1
      %p232 = por %p230, %p231
      %p233 = scmp.ne.s32.totalorder %s225, %s228
      %p234 = scmp.eq.s32.totalorder %s27, 0
      %p235 = por %p233, %p234
      %p236 = scmp.ne.s32.totalorder %s225, %s228
      %p237 = scmp.eq.s32.totalorder %s32, 1
      %p238 = por %p236, %p237
      %p239 = scmp.ne.s32.totalorder %s228, %s229
      %p240 = scmp.eq.s32.totalorder %s32, 0
      %p241 = por %p239, %p240
      %p242 = scmp.ne.s32.totalorder %s228, %s229
      %p243 = scmp.eq.s32.totalorder %s33, 1
      %p244 = por %p242, %p243
      %p246 = scmp.ne.s32.totalorder %s229, %s245
      %p247 = scmp.eq.s32.totalorder %s33, 0
      %p248 = por %p246, %p247
      %s249 = ssub.s32 %s27, %s34
      %p250 = scmp.eq.s32.totalorder %s249, 0
      %s252 = sadd.s32 %s251, 1
      %s253 = scalar_select %p250, %s251, %s252
      %p256 = pneg %p250
      %p257 = scmp.eq.s32.totalorder %s27, 1
      %p258 = por %p256, %p257
      %p259 = scmp.ne.s32.totalorder %s251, %s254
      %p260 = scmp.eq.s32.totalorder %s27, 0
      %p261 = por %p259, %p260
      %p262 = scmp.ne.s32.totalorder %s251, %s254
      %p263 = scmp.eq.s32.totalorder %s32, 1
      %p264 = por %p262, %p263
      %p265 = scmp.ne.s32.totalorder %s254, %s255
      %p266 = scmp.eq.s32.totalorder %s32, 0
      %p267 = por %p265, %p266
      %p268 = scmp.ne.s32.totalorder %s254, %s255
      %p269 = scmp.eq.s32.totalorder %s33, 1
      %p270 = por %p268, %p269
      %p272 = scmp.ne.s32.totalorder %s255, %s271
      %p273 = scmp.eq.s32.totalorder %s33, 0
      %p274 = por %p272, %p273
      %s275 = ssub.s32 %s27, %s34
      %p276 = scmp.eq.s32.totalorder %s275, 0
      %s278 = sadd.s32 %s277, 1
      %s279 = scalar_select %p276, %s277, %s278
      %p282 = pneg %p276
      %p283 = scmp.eq.s32.totalorder %s27, 1
      %p284 = por %p282, %p283
      %p285 = scmp.ne.s32.totalorder %s277, %s280
      %p286 = scmp.eq.s32.totalorder %s27, 0
      %p287 = por %p285, %p286
      %p288 = scmp.ne.s32.totalorder %s277, %s280
      %p289 = scmp.eq.s32.totalorder %s32, 1
      %p290 = por %p288, %p289
      %p291 = scmp.ne.s32.totalorder %s280, %s281
      %p292 = scmp.eq.s32.totalorder %s32, 0
      %p293 = por %p291, %p292
      %p294 = scmp.ne.s32.totalorder %s280, %s281
      %p295 = scmp.eq.s32.totalorder %s33, 1
      %p296 = por %p294, %p295
      %p298 = scmp.ne.s32.totalorder %s281, %s297
      %p299 = scmp.eq.s32.totalorder %s33, 0
      %p300 = por %p298, %p299
      %s301 = ssub.s32 %s27, %s34
      %p302 = scmp.eq.s32.totalorder %s301, 0
      %s304 = sadd.s32 %s303, 1
      %s305 = scalar_select %p302, %s303, %s304
      %p308 = pneg %p302
      %p309 = scmp.eq.s32.totalorder %s27, 1
      %p310 = por %p308, %p309
      %p311 = scmp.ne.s32.totalorder %s303, %s306
      %p312 = scmp.eq.s32.totalorder %s27, 0
      %p313 = por %p311, %p312
      %p314 = scmp.ne.s32.totalorder %s303, %s306
      %p315 = scmp.eq.s32.totalorder %s32, 1
      %p316 = por %p314, %p315
      %p317 = scmp.ne.s32.totalorder %s306, %s307
      %p318 = scmp.eq.s32.totalorder %s32, 0
      %p319 = por %p317, %p318
      %p320 = scmp.ne.s32.totalorder %s306, %s307
      %p321 = scmp.eq.s32.totalorder %s33, 1
      %p322 = por %p320, %p321
      %p324 = scmp.ne.s32.totalorder %s307, %s323
      %p325 = scmp.eq.s32.totalorder %s33, 0
      %p326 = por %p324, %p325
      %p327 = scmp.le.s32.totalorder 1, %s27
      %p328 = scmp.lt.s32.totalorder %s27, 3
      %p329 = pnand %p327, %p328
      %p330 = pneg %p329
      // Predicated region
      $region9: #{deform_network_gaussian_forward.1} parent=5 // pred_check
        _
      $region10: #{deform_network_gaussian_forward.1} parent=5 // pred_check_branch
        %332 = sbr.rel (%p329) target = $region12
      $region11: #{deform_network_gaussian_forward.1} parent=5 // pred_region
        %s333 = ssub.s32 %s27, 1
        // Predicated region
        $region13: #{deform_network_gaussian_forward.1} parent=11 // pred_check
          %p334 = pneg %p152
        $region14: #{deform_network_gaussian_forward.1} parent=11 // pred_check_branch
          %336 = sbr.rel (%p334) target = $region16
        $region15: #{deform_network_gaussian_forward.1} parent=11 // pred_region
          _
        $region16: #{deform_network_gaussian_forward.1} parent=11 // pred_fallthru
          _
        // Predicated region
        $region17: #{deform_network_gaussian_forward.1} parent=11 // pred_check
          %p337 = pneg %p173
        $region18: #{deform_network_gaussian_forward.1} parent=11 // pred_check_branch
          %339 = sbr.rel (%p337) target = $region20
        $region19: #{deform_network_gaussian_forward.1} parent=11 // pred_region
          _
        $region20: #{deform_network_gaussian_forward.1} parent=11 // pred_fallthru
          _
        // Predicated region
        $region21: #{deform_network_gaussian_forward.1} parent=11 // pred_check
          %p340 = pneg %p194
        $region22: #{deform_network_gaussian_forward.1} parent=11 // pred_check_branch
          %342 = sbr.rel (%p340) target = $region24
        $region23: #{deform_network_gaussian_forward.1} parent=11 // pred_region
          _
        $region24: #{deform_network_gaussian_forward.1} parent=11 // pred_fallthru
          _
        // Predicated region
        $region25: #{deform_network_gaussian_forward.1} parent=11 // pred_check
          %p343 = pneg %p215
        $region26: #{deform_network_gaussian_forward.1} parent=11 // pred_check_branch
          %345 = sbr.rel (%p343) target = $region28
        $region27: #{deform_network_gaussian_forward.1} parent=11 // pred_region
          _
        $region28: #{deform_network_gaussian_forward.1} parent=11 // pred_fallthru
          _
      $region12: #{deform_network_gaussian_forward.1} parent=5 // pred_fallthru
        _
      %p346 = scmp.lt.s32.totalorder %s27, 2
      // Predicated region
      $region29: #{deform_network_gaussian_forward.1} parent=5 // pred_check
        %p347 = pneg %p346
      $region30: #{deform_network_gaussian_forward.1} parent=5 // pred_check_branch
        %349 = sbr.rel (%p347) target = $region32
      $region31: #{deform_network_gaussian_forward.1} parent=5 // pred_region
        // Predicated region
        $region33: #{deform_network_gaussian_forward.1} parent=31 // pred_check
          %p350 = pneg %p47
        $region34: #{deform_network_gaussian_forward.1} parent=31 // pred_check_branch
          %352 = sbr.rel (%p350) target = $region36
        $region35: #{deform_network_gaussian_forward.1} parent=31 // pred_region
          %s353 = smul.u32 4, %s27
          %p354 = scmp.lt.s32.totalorder %s353, 7
          %s355 = scalar_select %p354, %s353, 7
          %s356 = smul.addr %s355, 4
          %s357 = scalar_lea.vmem %s0, %s356
          %s358 = smul.u32 4, %s27
        $region36: #{deform_network_gaussian_forward.1} parent=31 // pred_fallthru
          _
        // Predicated region
        $region37: #{deform_network_gaussian_forward.1} parent=31 // pred_check
          %p359 = pneg %p73
        $region38: #{deform_network_gaussian_forward.1} parent=31 // pred_check_branch
          %361 = sbr.rel (%p359) target = $region40
        $region39: #{deform_network_gaussian_forward.1} parent=31 // pred_region
          %s362 = smul.u32 4, %s27
          %p363 = scmp.lt.s32.totalorder %s362, 7
          %s364 = scalar_select %p363, %s362, 7
          %s365 = smul.addr %s364, 4
          %s366 = scalar_lea.vmem %s1, %s365
          %s367 = smul.u32 4, %s27
        $region40: #{deform_network_gaussian_forward.1} parent=31 // pred_fallthru
          _
        // Predicated region
        $region41: #{deform_network_gaussian_forward.1} parent=31 // pred_check
          %p368 = pneg %p99
        $region42: #{deform_network_gaussian_forward.1} parent=31 // pred_check_branch
          %370 = sbr.rel (%p368) target = $region44
        $region43: #{deform_network_gaussian_forward.1} parent=31 // pred_region
          %s371 = smul.u32 4, %s27
          %p372 = scmp.lt.s32.totalorder %s371, 7
          %s373 = scalar_select %p372, %s371, 7
          %s374 = smul.addr %s373, 4
          %s375 = scalar_lea.vmem %s2, %s374
          %s376 = smul.u32 4, %s27
        $region44: #{deform_network_gaussian_forward.1} parent=31 // pred_fallthru
          _
        // Predicated region
        $region45: #{deform_network_gaussian_forward.1} parent=31 // pred_check
          %p377 = pneg %p125
        $region46: #{deform_network_gaussian_forward.1} parent=31 // pred_check_branch
          %379 = sbr.rel (%p377) target = $region48
        $region47: #{deform_network_gaussian_forward.1} parent=31 // pred_region
          %s380 = smul.u32 4, %s27
          %p381 = scmp.lt.s32.totalorder %s380, 7
          %s382 = scalar_select %p381, %s380, 7
          %s383 = scalar_lea.vmem %s3, %s382
          %s384 = smul.u32 4, %s27
        $region48: #{deform_network_gaussian_forward.1} parent=31 // pred_fallthru
          _
      $region32: #{deform_network_gaussian_forward.1} parent=5 // pred_fallthru
        _
      %p385 = scmp.le.s32.totalorder 1, %s27
      %p386 = scmp.lt.s32.totalorder %s27, 3
      %p387 = pnand %p385, %p386
      %p388 = pneg %p387
      // Predicated region
      $region49: #{deform_network_gaussian_forward.1} parent=5 // pred_check
        _
      $region50: #{deform_network_gaussian_forward.1} parent=5 // pred_check_branch
        %390 = sbr.rel (%p387) target = $region52
      $region51: #{deform_network_gaussian_forward.1} parent=5 // pred_region
        %s391 = ssub.s32 %s27, 1
        %s392 = smul.u32 4, %s32
        %p393 = scmp.lt.s32.totalorder %s392, 7
        %s394 = scalar_select %p393, %s392, 7
        %s395 = smul.addr %s394, 4
        %s396 = scalar_lea.vmem %s0, %s395
        %p397 = pneg %p53
        %p398 = pneg %p50
        %s399 = smul.u32 4, %s32
        %p400 = scmp.lt.s32.totalorder %s399, 7
        %s401 = scalar_select %p400, %s399, 7
        %s402 = smul.addr %s401, 4
        %s403 = scalar_lea.vmem %s1, %s402
        %p404 = pneg %p79
        %p405 = pneg %p76
        %s406 = smul.u32 4, %s32
        %p407 = scmp.lt.s32.totalorder %s406, 7
        %s408 = scalar_select %p407, %s406, 7
        %s409 = smul.addr %s408, 4
        %s410 = scalar_lea.vmem %s2, %s409
        %p411 = pneg %p105
        %p412 = pneg %p102
        %s413 = smul.u32 4, %s32
        %p414 = scmp.lt.s32.totalorder %s413, 7
        %s415 = scalar_select %p414, %s413, 7
        %s416 = scalar_lea.vmem %s3, %s415
        %p417 = pneg %p131
        %p418 = pneg %p128
        %p419 = pneg %p152
        %p420 = pneg %p149
        %p421 = pneg %p173
        %p422 = pneg %p170
        %p423 = pneg %p194
        %p424 = pneg %p191
        %p425 = pneg %p215
        %p426 = pneg %p212
        %p427 = pneg %p241
        %p428 = pneg %p238
        %s429 = sand.u32 %s228, 1
        %s430 = scalar_lea.sflag [#allocation3], %s429
        %s431 = sand.u32 %s228, 1
        %s432 = smul.addr %s431, 16
        %s433 = scalar_lea.vmem [#allocation2], %s432
        %p434 = pneg %p267
        %p435 = pneg %p264
        %s436 = sand.u32 %s32, 1
        %s437 = scalar_lea.sflag [#allocation5], %s436
        %s438 = sand.u32 %s254, 1
        %s439 = smul.addr %s438, 16
        %s440 = scalar_lea.vmem [#allocation4], %s439
        %p441 = pneg %p293
        %p442 = pneg %p290
        %s443 = sand.u32 %s32, 1
        %s444 = scalar_lea.sflag [#allocation5], %s443
        %s445 = sand.u32 %s280, 1
        %s446 = smul.addr %s445, 16
        %s447 = scalar_lea.vmem [#allocation6], %s446
        %p448 = pneg %p319
        %p449 = pneg %p316
        %s450 = sand.u32 %s306, 1
        %s451 = scalar_lea.sflag [#allocation8], %s450
        %s452 = sand.u32 %s306, 1
        %s453 = smul.addr %s452, 4
        %s454 = scalar_lea.vmem [#allocation7], %s453
        %s455 = smul.u32 4, %s32
        %p456 = scmp.lt.s32.totalorder %s455, 7
        %s457 = scalar_select %p456, %s455, 7
        %s458 = smul.addr %s457, 4
        %s459 = scalar_lea.vmem %s0, %s458
        %s460 = smul.u32 4, %s32
        %s461 = smul.u32 4, %s32
        %p462 = scmp.lt.s32.totalorder %s461, 7
        %s463 = scalar_select %p462, %s461, 7
        %s464 = smul.addr %s463, 4
        %s465 = scalar_lea.vmem %s1, %s464
        %s466 = smul.u32 4, %s32
        %s467 = smul.u32 4, %s32
        %p468 = scmp.lt.s32.totalorder %s467, 7
        %s469 = scalar_select %p468, %s467, 7
        %s470 = smul.addr %s469, 4
        %s471 = scalar_lea.vmem %s2, %s470
        %s472 = smul.u32 4, %s32
        %s473 = smul.u32 4, %s32
        %p474 = scmp.lt.s32.totalorder %s473, 7
        %s475 = scalar_select %p474, %s473, 7
        %s476 = scalar_lea.vmem %s3, %s475
        %s477 = smul.u32 4, %s32
        %s478 = smul.u32 4, %s32
        %s479 = smul.u32 4, %s32
        %s480 = smul.u32 4, %s32
        %s481 = smul.u32 4, %s32
        %v483 = vld [vmem:[%s459] sm:$0xff]
        %v484 = vld [vmem:[%s459 + $0x8] sm:$0xff]
        %v485 = vld [vmem:[%s4] sm:$0xff]
        %v486 = vld [vmem:[%s4 + $0x8] sm:$0xff]
        %v487 = vld [vmem:[%s4 + $0x10] sm:$0xff]
        %v488 = vld [vmem:[%s4 + $0x18] sm:$0xff]
        %v489 = vld [vmem:[%s7] sm:$0xff]
        %v490 = vld [vmem:[%s7 + $0x8] sm:$0xff]
        %v491 = vld [vmem:[%s7 + $0x10] sm:$0xff]
        %v492 = vld [vmem:[%s7 + $0x18] sm:$0xff]
        %494 = vset.pattern.permute.xlu0 0
        %495 = vperm.xlu0 %494, %v485
        %v496 = vpop.permute.xlu0 %495
        %499 = vset.pattern.permute.xlu0 0
        %500 = vperm.xlu0 %499, %v486
        %v501 = vpop.permute.xlu0 %500
        %504 = vset.pattern.permute.xlu0 0
        %505 = vperm.xlu0 %504, %v487
        %v506 = vpop.permute.xlu0 %505
        %509 = vset.pattern.permute.xlu0 0
        %510 = vperm.xlu0 %509, %v488
        %v511 = vpop.permute.xlu0 %510
        %v515 = vlaneseq
        %v516 = vshrl.u32 %v515, 7
        %v517 = vsub.s32 0, %v516
        %v518 = vrot.slane %v483, %v517
        %v519 = vlaneseq
        %v520 = vshrl.u32 %v519, 7
        %v521 = vsub.s32 4, %v520
        %v522 = vrot.slane %v483, %v521
        %v523 = vlaneseq
        %v524 = vshrl.u32 %v523, 7
        %v525 = vsub.s32 0, %v524
        %v526 = vrot.slane %v484, %v525
        %v527 = vlaneseq
        %v528 = vshrl.u32 %v527, 7
        %v529 = vsub.s32 4, %v528
        %v530 = vrot.slane %v484, %v529
        %v535 = vlaneseq
        %v536 = vshrl.u32 %v535, 7
        %v537 = vsub.s32 0, %v536
        %v538 = vrot.slane %v518, %v537
        %v539 = vlaneseq
        %v540 = vshrl.u32 %v539, 7
        %v541 = vsub.s32 0, %v540
        %v542 = vrot.slane %v522, %v541
        %v543 = vlaneseq
        %v544 = vshrl.u32 %v543, 7
        %v545 = vsub.s32 0, %v544
        %v546 = vrot.slane %v526, %v545
        %v547 = vlaneseq
        %v548 = vshrl.u32 %v547, 7
        %v549 = vsub.s32 0, %v548
        %v550 = vrot.slane %v530, %v549
        %v551 = vmul.f32 %v496, %v538
        %v552 = vmul.f32 %v496, %v542
        %v553 = vmul.f32 %v496, %v546
        %v554 = vmul.f32 %v496, %v550
        %v555 = vmul.f32 %v501, %v538
        %v556 = vmul.f32 %v501, %v542
        %v557 = vmul.f32 %v501, %v546
        %v558 = vmul.f32 %v501, %v550
        %v559 = vmul.f32 %v506, %v538
        %v560 = vmul.f32 %v506, %v542
        %v561 = vmul.f32 %v506, %v546
        %v562 = vmul.f32 %v506, %v550
        %v563 = vmul.f32 %v511, %v538
        %v564 = vmul.f32 %v511, %v542
        %v565 = vmul.f32 %v511, %v546
        %v566 = vmul.f32 %v511, %v550
        %568 = vset.pattern.permute.xlu0 0
        %569 = vperm.xlu0 %568, %v489
        %v570 = vpop.permute.xlu0 %569
        %573 = vset.pattern.permute.xlu0 0
        %574 = vperm.xlu0 %573, %v490
        %v575 = vpop.permute.xlu0 %574
        %578 = vset.pattern.permute.xlu0 0
        %579 = vperm.xlu0 %578, %v491
        %v580 = vpop.permute.xlu0 %579
        %583 = vset.pattern.permute.xlu0 0
        %584 = vperm.xlu0 %583, %v492
        %v585 = vpop.permute.xlu0 %584
        %v587 = vadd.f32 %v570, %v551
        %v588 = vadd.f32 %v570, %v552
        %v589 = vadd.f32 %v570, %v553
        %v590 = vadd.f32 %v570, %v554
        %v591 = vadd.f32 %v575, %v555
        %v592 = vadd.f32 %v575, %v556
        %v593 = vadd.f32 %v575, %v557
        %v594 = vadd.f32 %v575, %v558
        %v595 = vadd.f32 %v580, %v559
        %v596 = vadd.f32 %v580, %v560
        %v597 = vadd.f32 %v580, %v561
        %v598 = vadd.f32 %v580, %v562
        %v599 = vadd.f32 %v585, %v563
        %v600 = vadd.f32 %v585, %v564
        %v601 = vadd.f32 %v585, %v565
        %v602 = vadd.f32 %v585, %v566
        %603 = vset.pattern.permute.xlu0 1
        %604 = vperm.xlu0 %603, %v485
        %v605 = vpop.permute.xlu0 %604
        %607 = vset.pattern.permute.xlu0 1
        %608 = vperm.xlu0 %607, %v486
        %v609 = vpop.permute.xlu0 %608
        %611 = vset.pattern.permute.xlu0 1
        %612 = vperm.xlu0 %611, %v487
        %v613 = vpop.permute.xlu0 %612
        %615 = vset.pattern.permute.xlu0 1
        %616 = vperm.xlu0 %615, %v488
        %v617 = vpop.permute.xlu0 %616
        %v619 = vlaneseq
        %v620 = vshrl.u32 %v619, 7
        %v621 = vsub.s32 1, %v620
        %v622 = vrot.slane %v483, %v621
        %v623 = vlaneseq
        %v624 = vshrl.u32 %v623, 7
        %v625 = vsub.s32 5, %v624
        %v626 = vrot.slane %v483, %v625
        %v627 = vlaneseq
        %v628 = vshrl.u32 %v627, 7
        %v629 = vsub.s32 1, %v628
        %v630 = vrot.slane %v484, %v629
        %v631 = vlaneseq
        %v632 = vshrl.u32 %v631, 7
        %v633 = vsub.s32 5, %v632
        %v634 = vrot.slane %v484, %v633
        %v639 = vlaneseq
        %v640 = vshrl.u32 %v639, 7
        %v641 = vsub.s32 1, %v640
        %v642 = vrot.slane %v622, %v641
        %v643 = vlaneseq
        %v644 = vshrl.u32 %v643, 7
        %v645 = vsub.s32 1, %v644
        %v646 = vrot.slane %v626, %v645
        %v647 = vlaneseq
        %v648 = vshrl.u32 %v647, 7
        %v649 = vsub.s32 1, %v648
        %v650 = vrot.slane %v630, %v649
        %v651 = vlaneseq
        %v652 = vshrl.u32 %v651, 7
        %v653 = vsub.s32 1, %v652
        %v654 = vrot.slane %v634, %v653
        %v655 = vmul.f32 %v605, %v642
        %v656 = vmul.f32 %v605, %v646
        %v657 = vmul.f32 %v605, %v650
        %v658 = vmul.f32 %v605, %v654
        %v659 = vmul.f32 %v609, %v642
        %v660 = vmul.f32 %v609, %v646
        %v661 = vmul.f32 %v609, %v650
        %v662 = vmul.f32 %v609, %v654
        %v663 = vmul.f32 %v613, %v642
        %v664 = vmul.f32 %v613, %v646
        %v665 = vmul.f32 %v613, %v650
        %v666 = vmul.f32 %v613, %v654
        %v667 = vmul.f32 %v617, %v642
        %v668 = vmul.f32 %v617, %v646
        %v669 = vmul.f32 %v617, %v650
        %v670 = vmul.f32 %v617, %v654
        %v671 = vadd.f32 %v587, %v655
        %v672 = vadd.f32 %v588, %v656
        %v673 = vadd.f32 %v589, %v657
        %v674 = vadd.f32 %v590, %v658
        %v675 = vadd.f32 %v591, %v659
        %v676 = vadd.f32 %v592, %v660
        %v677 = vadd.f32 %v593, %v661
        %v678 = vadd.f32 %v594, %v662
        %v679 = vadd.f32 %v595, %v663
        %v680 = vadd.f32 %v596, %v664
        %v681 = vadd.f32 %v597, %v665
        %v682 = vadd.f32 %v598, %v666
        %v683 = vadd.f32 %v599, %v667
        %v684 = vadd.f32 %v600, %v668
        %v685 = vadd.f32 %v601, %v669
        %v686 = vadd.f32 %v602, %v670
        %687 = vset.pattern.permute.xlu0 2
        %688 = vperm.xlu0 %687, %v485
        %v689 = vpop.permute.xlu0 %688
        %691 = vset.pattern.permute.xlu0 2
        %692 = vperm.xlu0 %691, %v486
        %v693 = vpop.permute.xlu0 %692
        %695 = vset.pattern.permute.xlu0 2
        %696 = vperm.xlu0 %695, %v487
        %v697 = vpop.permute.xlu0 %696
        %699 = vset.pattern.permute.xlu0 2
        %700 = vperm.xlu0 %699, %v488
        %v701 = vpop.permute.xlu0 %700
        %v703 = vlaneseq
        %v704 = vshrl.u32 %v703, 7
        %v705 = vsub.s32 2, %v704
        %v706 = vrot.slane %v483, %v705
        %v707 = vlaneseq
        %v708 = vshrl.u32 %v707, 7
        %v709 = vsub.s32 6, %v708
        %v710 = vrot.slane %v483, %v709
        %v711 = vlaneseq
        %v712 = vshrl.u32 %v711, 7
        %v713 = vsub.s32 2, %v712
        %v714 = vrot.slane %v484, %v713
        %v715 = vlaneseq
        %v716 = vshrl.u32 %v715, 7
        %v717 = vsub.s32 6, %v716
        %v718 = vrot.slane %v484, %v717
        %v723 = vlaneseq
        %v724 = vshrl.u32 %v723, 7
        %v725 = vsub.s32 2, %v724
        %v726 = vrot.slane %v706, %v725
        %v727 = vlaneseq
        %v728 = vshrl.u32 %v727, 7
        %v729 = vsub.s32 2, %v728
        %v730 = vrot.slane %v710, %v729
        %v731 = vlaneseq
        %v732 = vshrl.u32 %v731, 7
        %v733 = vsub.s32 2, %v732
        %v734 = vrot.slane %v714, %v733
        %v735 = vlaneseq
        %v736 = vshrl.u32 %v735, 7
        %v737 = vsub.s32 2, %v736
        %v738 = vrot.slane %v718, %v737
        %v739 = vmul.f32 %v689, %v726
        %v740 = vmul.f32 %v689, %v730
        %v741 = vmul.f32 %v689, %v734
        %v742 = vmul.f32 %v689, %v738
        %v743 = vmul.f32 %v693, %v726
        %v744 = vmul.f32 %v693, %v730
        %v745 = vmul.f32 %v693, %v734
        %v746 = vmul.f32 %v693, %v738
        %v747 = vmul.f32 %v697, %v726
        %v748 = vmul.f32 %v697, %v730
        %v749 = vmul.f32 %v697, %v734
        %v750 = vmul.f32 %v697, %v738
        %v751 = vmul.f32 %v701, %v726
        %v752 = vmul.f32 %v701, %v730
        %v753 = vmul.f32 %v701, %v734
        %v754 = vmul.f32 %v701, %v738
        %v755 = vadd.f32 %v671, %v739
        %v756 = vadd.f32 %v672, %v740
        %v757 = vadd.f32 %v673, %v741
        %v758 = vadd.f32 %v674, %v742
        %v759 = vadd.f32 %v675, %v743
        %v760 = vadd.f32 %v676, %v744
        %v761 = vadd.f32 %v677, %v745
        %v762 = vadd.f32 %v678, %v746
        %v763 = vadd.f32 %v679, %v747
        %v764 = vadd.f32 %v680, %v748
        %v765 = vadd.f32 %v681, %v749
        %v766 = vadd.f32 %v682, %v750
        %v767 = vadd.f32 %v683, %v751
        %v768 = vadd.f32 %v684, %v752
        %v769 = vadd.f32 %v685, %v753
        %v770 = vadd.f32 %v686, %v754
        %771 = vset.pattern.permute.xlu0 3
        %772 = vperm.xlu0 %771, %v485
        %v773 = vpop.permute.xlu0 %772
        %775 = vset.pattern.permute.xlu0 3
        %776 = vperm.xlu0 %775, %v486
        %v777 = vpop.permute.xlu0 %776
        %779 = vset.pattern.permute.xlu0 3
        %780 = vperm.xlu0 %779, %v487
        %v781 = vpop.permute.xlu0 %780
        %783 = vset.pattern.permute.xlu0 3
        %784 = vperm.xlu0 %783, %v488
        %v785 = vpop.permute.xlu0 %784
        %v787 = vlaneseq
        %v788 = vshrl.u32 %v787, 7
        %v789 = vsub.s32 3, %v788
        %v790 = vrot.slane %v483, %v789
        %v791 = vlaneseq
        %v792 = vshrl.u32 %v791, 7
        %v793 = vsub.s32 7, %v792
        %v794 = vrot.slane %v483, %v793
        %v795 = vlaneseq
        %v796 = vshrl.u32 %v795, 7
        %v797 = vsub.s32 3, %v796
        %v798 = vrot.slane %v484, %v797
        %v799 = vlaneseq
        %v800 = vshrl.u32 %v799, 7
        %v801 = vsub.s32 7, %v800
        %v802 = vrot.slane %v484, %v801
        %v807 = vlaneseq
        %v808 = vshrl.u32 %v807, 7
        %v809 = vsub.s32 3, %v808
        %v810 = vrot.slane %v790, %v809
        %v811 = vlaneseq
        %v812 = vshrl.u32 %v811, 7
        %v813 = vsub.s32 3, %v812
        %v814 = vrot.slane %v794, %v813
        %v815 = vlaneseq
        %v816 = vshrl.u32 %v815, 7
        %v817 = vsub.s32 3, %v816
        %v818 = vrot.slane %v798, %v817
        %v819 = vlaneseq
        %v820 = vshrl.u32 %v819, 7
        %v821 = vsub.s32 3, %v820
        %v822 = vrot.slane %v802, %v821
        %v823 = vmul.f32 %v773, %v810
        %v824 = vmul.f32 %v773, %v814
        %v825 = vmul.f32 %v773, %v818
        %v826 = vmul.f32 %v773, %v822
        %v827 = vmul.f32 %v777, %v810
        %v828 = vmul.f32 %v777, %v814
        %v829 = vmul.f32 %v777, %v818
        %v830 = vmul.f32 %v777, %v822
        %v831 = vmul.f32 %v781, %v810
        %v832 = vmul.f32 %v781, %v814
        %v833 = vmul.f32 %v781, %v818
        %v834 = vmul.f32 %v781, %v822
        %v835 = vmul.f32 %v785, %v810
        %v836 = vmul.f32 %v785, %v814
        %v837 = vmul.f32 %v785, %v818
        %v838 = vmul.f32 %v785, %v822
        %v839 = vadd.f32 %v755, %v823
        %v840 = vadd.f32 %v756, %v824
        %v841 = vadd.f32 %v757, %v825
        %v842 = vadd.f32 %v758, %v826
        %v843 = vadd.f32 %v759, %v827
        %v844 = vadd.f32 %v760, %v828
        %v845 = vadd.f32 %v761, %v829
        %v846 = vadd.f32 %v762, %v830
        %v847 = vadd.f32 %v763, %v831
        %v848 = vadd.f32 %v764, %v832
        %v849 = vadd.f32 %v765, %v833
        %v850 = vadd.f32 %v766, %v834
        %v851 = vadd.f32 %v767, %v835
        %v852 = vadd.f32 %v768, %v836
        %v853 = vadd.f32 %v769, %v837
        %v854 = vadd.f32 %v770, %v838
        %v855 = vld [vmem:[%s5] sm:$0xf]
        %v856 = vld [vmem:[%s5 + $0x4] sm:$0xf]
        %v857 = vld [vmem:[%s5 + $0x8] sm:$0xf]
        %v858 = vld [vmem:[%s5 + $0xc] sm:$0xf]
        %v859 = vmax.f32 %v839, 0.0
        %v860 = vmax.f32 %v840, 0.0
        %v861 = vmax.f32 %v841, 0.0
        %v862 = vmax.f32 %v842, 0.0
        %v863 = vmax.f32 %v843, 0.0
        %v864 = vmax.f32 %v844, 0.0
        %v865 = vmax.f32 %v845, 0.0
        %v866 = vmax.f32 %v846, 0.0
        %v867 = vmax.f32 %v847, 0.0
        %v868 = vmax.f32 %v848, 0.0
        %v869 = vmax.f32 %v849, 0.0
        %v870 = vmax.f32 %v850, 0.0
        %v871 = vmax.f32 %v851, 0.0
        %v872 = vmax.f32 %v852, 0.0
        %v873 = vmax.f32 %v853, 0.0
        %v874 = vmax.f32 %v854, 0.0
        %v875 = vpack.c.bf16 %v863, %v859
        %v876 = vpack.c.bf16 %v864, %v860
        %v877 = vpack.c.bf16 %v865, %v861
        %v878 = vpack.c.bf16 %v866, %v862
        %v879 = vpack.c.bf16 %v871, %v867
        %v880 = vpack.c.bf16 %v872, %v868
        %v881 = vpack.c.bf16 %v873, %v869
        %v882 = vpack.c.bf16 %v874, %v870
        %v883 = vld [vmem:[%s7 + $0x20] sm:$0xff]
        %v884 = vld [vmem:[%s7 + $0x28] sm:$0xff]
        %v885 = vld [vmem:[%s7 + $0x30] sm:$0xff]
        %v886 = vld [vmem:[%s7 + $0x38] sm:$0xff]
        %888 = vset.pattern.permute.xlu0 0
        %889 = vperm.xlu0 %888, %v883
        %v890 = vpop.permute.xlu0 %889
        %893 = vset.pattern.permute.xlu0 0
        %894 = vperm.xlu0 %893, %v884
        %v895 = vpop.permute.xlu0 %894
        %898 = vset.pattern.permute.xlu0 0
        %899 = vperm.xlu0 %898, %v885
        %v900 = vpop.permute.xlu0 %899
        %903 = vset.pattern.permute.xlu0 0
        %904 = vperm.xlu0 %903, %v886
        %v905 = vpop.permute.xlu0 %904
        %v911 = vunpack.c.l.b16 %v855
        %v912 = vunpack.c.l.b16 %v856
        %v913 = vunpack.c.l.b16 %v857
        %v914 = vunpack.c.l.b16 %v858
        %v915 = vpack.c.b16 %v912, %v911
        %v916 = vpack.c.b16 %v914, %v913
        %vm917 = vcmask 261120
        %v919 = vsel %vm917, %v915, 0
        %v922 = vsel %vm917, %v916, 0
        %924 = vmatprep.subr.bf16.mxu0 %v876
        %925 = vmatpush1.bf16.msra.mxu0 %v875
        %926 = vmatprep.subr.bf16.mxu0 %v880
        %927 = vmatpush1.bf16.msra.mxu0 %v879
        %928 = vmatprep.subr.bf16.mxu0 0
        %929 = vmatpush1.bf16.msra.mxu0 0
        %930 = vmatprep.subr.bf16.mxu0 0
        %931 = vmatpush1.bf16.msra.mxu0 0
        %932 = vmatprep.subr.bf16.mxu0 0
        %933 = vmatpush1.bf16.msra.mxu0 0
        %934 = vmatprep.subr.bf16.mxu0 0
        %935 = vmatpush1.bf16.msra.mxu0 0
        %936 = vmatprep.subr.bf16.mxu0 0
        %937 = vmatpush1.bf16.msra.mxu0 0
        %938 = vmatprep.subr.bf16.mxu0 0
        %939 = vmatpush1.bf16.msra.mxu0 0
        %940 = vmatprep.subr.bf16.mxu0 0
        %941 = vmatpush1.bf16.msra.mxu0 0
        %942 = vmatprep.subr.bf16.mxu0 0
        %943 = vmatpush1.bf16.msra.mxu0 0
        %944 = vmatprep.subr.bf16.mxu0 0
        %945 = vmatpush1.bf16.msra.mxu0 0
        %946 = vmatprep.subr.bf16.mxu0 0
        %947 = vmatpush1.bf16.msra.mxu0 0
        %948 = vmatprep.subr.bf16.mxu0 0
        %949 = vmatpush1.bf16.msra.mxu0 0
        %950 = vmatprep.subr.bf16.mxu0 0
        %951 = vmatpush1.bf16.msra.mxu0 0
        %952 = vmatprep.subr.bf16.mxu0 0
        %953 = vmatpush1.bf16.msra.mxu0 0
        %954 = vmatprep.subr.bf16.mxu0 0
        %955 = vmatpush1.bf16.msra.mxu0 0
        %956 = vmatprep.mubr.bf16.mxu0 0
        %957 = vmatmul.mubr.bf16.gmra.mrb[0].mxu0 %v919
        %v958 = vpop.f32.mrb[0].mxu0
        %v959 = vadd.f32 %v890, %v958
        %v960 = vpop.f32.mrb[0].mxu0
        %v961 = vadd.f32 %v890, %v960
        %v962 = vpop.f32.mrb[0].mxu0
        %v963 = vadd.f32 %v895, %v962
        %v964 = vpop.f32.mrb[0].mxu0
        %v965 = vadd.f32 %v895, %v964
        %966 = vmatprep.mubr.bf16.mxu0 0
        %967 = vmatmul.mubr.bf16.gmra.mrb[0].mxu0 %v922
        %v968 = vpop.f32.mrb[0].mxu0
        %v969 = vadd.f32 %v900, %v968
        %v970 = vpop.f32.mrb[0].mxu0
        %v971 = vadd.f32 %v900, %v970
        %v972 = vpop.f32.mrb[0].mxu0
        %v973 = vadd.f32 %v905, %v972
        %v974 = vpop.f32.mrb[0].mxu0
        %v975 = vadd.f32 %v905, %v974
        %976 = vdwg.mxu0
        %977 = vmatprep.subr.bf16.mxu0 %v878
        %978 = vmatpush1.bf16.msra.mxu0 %v877
        %979 = vmatprep.subr.bf16.mxu0 %v882
        %980 = vmatpush1.bf16.msra.mxu0 %v881
        %981 = vmatprep.subr.bf16.mxu0 0
        %982 = vmatpush1.bf16.msra.mxu0 0
        %983 = vmatprep.subr.bf16.mxu0 0
        %984 = vmatpush1.bf16.msra.mxu0 0
        %985 = vmatprep.subr.bf16.mxu0 0
        %986 = vmatpush1.bf16.msra.mxu0 0
        %987 = vmatprep.subr.bf16.mxu0 0
        %988 = vmatpush1.bf16.msra.mxu0 0
        %989 = vmatprep.subr.bf16.mxu0 0
        %990 = vmatpush1.bf16.msra.mxu0 0
        %991 = vmatprep.subr.bf16.mxu0 0
        %992 = vmatpush1.bf16.msra.mxu0 0
        %993 = vmatprep.subr.bf16.mxu0 0
        %994 = vmatpush1.bf16.msra.mxu0 0
        %995 = vmatprep.subr.bf16.mxu0 0
        %996 = vmatpush1.bf16.msra.mxu0 0
        %997 = vmatprep.subr.bf16.mxu0 0
        %998 = vmatpush1.bf16.msra.mxu0 0
        %999 = vmatprep.subr.bf16.mxu0 0
        %1000 = vmatpush1.bf16.msra.mxu0 0
        %1001 = vmatprep.subr.bf16.mxu0 0
        %1002 = vmatpush1.bf16.msra.mxu0 0
        %1003 = vmatprep.subr.bf16.mxu0 0
        %1004 = vmatpush1.bf16.msra.mxu0 0
        %1005 = vmatprep.subr.bf16.mxu0 0
        %1006 = vmatpush1.bf16.msra.mxu0 0
        %1007 = vmatprep.subr.bf16.mxu0 0
        %1008 = vmatpush1.bf16.msra.mxu0 0
        %1009 = vmatprep.mubr.bf16.mxu0 0
        %1010 = vmatmul.mubr.bf16.gmra.mrb[0].mxu0 %v919
        %v1011 = vpop.f32.mrb[0].mxu0
        %v1012 = vadd.f32 %v890, %v1011
        %v1013 = vpop.f32.mrb[0].mxu0
        %v1014 = vadd.f32 %v890, %v1013
        %v1015 = vpop.f32.mrb[0].mxu0
        %v1016 = vadd.f32 %v895, %v1015
        %v1017 = vpop.f32.mrb[0].mxu0
        %v1018 = vadd.f32 %v895, %v1017
        %1019 = vmatprep.mubr.bf16.mxu0 0
        %1020 = vmatmul.mubr.bf16.gmra.mrb[0].mxu0 %v922
        %v1021 = vpop.f32.mrb[0].mxu0
        %v1022 = vadd.f32 %v900, %v1021
        %v1023 = vpop.f32.mrb[0].mxu0
        %v1024 = vadd.f32 %v900, %v1023
        %v1025 = vpop.f32.mrb[0].mxu0
        %v1026 = vadd.f32 %v905, %v1025
        %v1027 = vpop.f32.mrb[0].mxu0
        %v1028 = vadd.f32 %v905, %v1027
        %1029 = vdwg.mxu0
        %v1030 = vld [vmem:[%s5 + $0x10] sm:$0xf]
        %v1031 = vld [vmem:[%s5 + $0x14] sm:$0xf]
        %v1032 = vld [vmem:[%s5 + $0x18] sm:$0xf]
        %v1033 = vld [vmem:[%s5 + $0x1c] sm:$0xf]
        %v1034 = vld [vmem:[%s5 + $0x20] sm:$0xf]
        %v1035 = vld [vmem:[%s5 + $0x24] sm:$0xf]
        %v1036 = vld [vmem:[%s5 + $0x28] sm:$0xf]
        %v1037 = vld [vmem:[%s5 + $0x2c] sm:$0xf]
        %v1038 = vld [vmem:[%s5 + $0x30] sm:$0xf]
        %v1039 = vld [vmem:[%s5 + $0x34] sm:$0xf]
        %v1040 = vld [vmem:[%s5 + $0x38] sm:$0xf]
        %v1041 = vld [vmem:[%s5 + $0x3c] sm:$0xf]
        %v1042 = vld [vmem:[%s5 + $0x40] sm:$0xf]
        %v1043 = vld [vmem:[%s5 + $0x44] sm:$0xf]
        %v1044 = vld [vmem:[%s5 + $0x48] sm:$0xf]
        %v1045 = vld [vmem:[%s5 + $0x4c] sm:$0xf]
        %v1046 = vmax.f32 %v959, 0.0
        %v1047 = vmax.f32 %v961, 0.0
        %v1048 = vmax.f32 %v1012, 0.0
        %v1049 = vmax.f32 %v1014, 0.0
        %v1050 = vmax.f32 %v963, 0.0
        %v1051 = vmax.f32 %v965, 0.0
        %v1052 = vmax.f32 %v1016, 0.0
        %v1053 = vmax.f32 %v1018, 0.0
        %v1054 = vmax.f32 %v969, 0.0
        %v1055 = vmax.f32 %v971, 0.0
        %v1056 = vmax.f32 %v1022, 0.0
        %v1057 = vmax.f32 %v1024, 0.0
        %v1058 = vmax.f32 %v973, 0.0
        %v1059 = vmax.f32 %v975, 0.0
        %v1060 = vmax.f32 %v1026, 0.0
        %v1061 = vmax.f32 %v1028, 0.0
        %v1062 = vpack.c.bf16 %v1050, %v1046
        %v1063 = vpack.c.bf16 %v1051, %v1047
        %v1064 = vpack.c.bf16 %v1052, %v1048
        %v1065 = vpack.c.bf16 %v1053, %v1049
        %v1066 = vpack.c.bf16 %v1058, %v1054
        %v1067 = vpack.c.bf16 %v1059, %v1055
        %v1068 = vpack.c.bf16 %v1060, %v1056
        %v1069 = vpack.c.bf16 %v1061, %v1057
        %v1070 = vld [vmem:[%s7 + $0x40] sm:$0xff]
        %v1071 = vld [vmem:[%s7 + $0x48] sm:$0xff]
        %v1072 = vld [vmem:[%s7 + $0x50] sm:$0xff]
        %v1073 = vld [vmem:[%s7 + $0x58] sm:$0xff]
        %v1074 = vld [vmem:[%s7 + $0x60] sm:$0xff]
        %v1075 = vld [vmem:[%s7 + $0x68] sm:$0xff]
        %v1076 = vld [vmem:[%s7 + $0x70] sm:$0xff]
        %v1077 = vld [vmem:[%s7 + $0x78] sm:$0xff]
        %v1078 = vld [vmem:[%s7 + $0x80] sm:$0xff]
        %v1079 = vld [vmem:[%s7 + $0x88] sm:$0xff]
        %v1080 = vld [vmem:[%s7 + $0x90] sm:$0xff]
        %v1081 = vld [vmem:[%s7 + $0x98] sm:$0xff]
        %v1082 = vld [vmem:[%s7 + $0xa0] sm:$0xff]
        %v1083 = vld [vmem:[%s7 + $0xa8] sm:$0xff]
        %v1084 = vld [vmem:[%s7 + $0xb0] sm:$0xff]
        %v1085 = vld [vmem:[%s7 + $0xb8] sm:$0xff]
        %1087 = vset.pattern.permute.xlu0 0
        %1088 = vperm.xlu0 %1087, %v1070
        %v1089 = vpop.permute.xlu0 %1088
        %1092 = vset.pattern.permute.xlu0 0
        %1093 = vperm.xlu0 %1092, %v1071
        %v1094 = vpop.permute.xlu0 %1093
        %1097 = vset.pattern.permute.xlu0 0
        %1098 = vperm.xlu0 %1097, %v1072
        %v1099 = vpop.permute.xlu0 %1098
        %1102 = vset.pattern.permute.xlu0 0
        %1103 = vperm.xlu0 %1102, %v1073
        %v1104 = vpop.permute.xlu0 %1103
        %1107 = vset.pattern.permute.xlu0 0
        %1108 = vperm.xlu0 %1107, %v1074
        %v1109 = vpop.permute.xlu0 %1108
        %1112 = vset.pattern.permute.xlu0 0
        %1113 = vperm.xlu0 %1112, %v1075
        %v1114 = vpop.permute.xlu0 %1113
        %1117 = vset.pattern.permute.xlu0 0
        %1118 = vperm.xlu0 %1117, %v1076
        %v1119 = vpop.permute.xlu0 %1118
        %1122 = vset.pattern.permute.xlu0 0
        %1123 = vperm.xlu0 %1122, %v1077
        %v1124 = vpop.permute.xlu0 %1123
        %1127 = vset.pattern.permute.xlu0 0
        %1128 = vperm.xlu0 %1127, %v1078
        %v1129 = vpop.permute.xlu0 %1128
        %1132 = vset.pattern.permute.xlu0 0
        %1133 = vperm.xlu0 %1132, %v1079
        %v1134 = vpop.permute.xlu0 %1133
        %1137 = vset.pattern.permute.xlu0 0
        %1138 = vperm.xlu0 %1137, %v1080
        %v1139 = vpop.permute.xlu0 %1138
        %1142 = vset.pattern.permute.xlu0 0
        %1143 = vperm.xlu0 %1142, %v1081
        %v1144 = vpop.permute.xlu0 %1143
        %1147 = vset.pattern.permute.xlu0 0
        %1148 = vperm.xlu0 %1147, %v1082
        %v1149 = vpop.permute.xlu0 %1148
        %1152 = vset.pattern.permute.xlu0 0
        %1153 = vperm.xlu0 %1152, %v1083
        %v1154 = vpop.permute.xlu0 %1153
        %1157 = vset.pattern.permute.xlu0 0
        %1158 = vperm.xlu0 %1157, %v1084
        %v1159 = vpop.permute.xlu0 %1158
        %1162 = vset.pattern.permute.xlu0 0
        %1163 = vperm.xlu0 %1162, %v1085
        %v1164 = vpop.permute.xlu0 %1163
        %v1182 = vunpack.c.l.b16 %v1030
        %v1183 = vunpack.c.l.b16 %v1031
        %v1184 = vunpack.c.l.b16 %v1032
        %v1185 = vunpack.c.l.b16 %v1033
        %v1186 = vunpack.c.l.b16 %v1034
        %v1187 = vunpack.c.l.b16 %v1035
        %v1188 = vunpack.c.l.b16 %v1036
        %v1189 = vunpack.c.l.b16 %v1037
        %v1190 = vunpack.c.l.b16 %v1038
        %v1191 = vunpack.c.l.b16 %v1039
        %v1192 = vunpack.c.l.b16 %v1040
        %v1193 = vunpack.c.l.b16 %v1041
        %v1194 = vunpack.c.l.b16 %v1042
        %v1195 = vunpack.c.l.b16 %v1043
        %v1196 = vunpack.c.l.b16 %v1044
        %v1197 = vunpack.c.l.b16 %v1045
        %v1198 = vpack.c.b16 %v1183, %v1182
        %v1199 = vpack.c.b16 %v1185, %v1184
        %v1200 = vpack.c.b16 %v1187, %v1186
        %v1201 = vpack.c.b16 %v1189, %v1188
        %v1202 = vpack.c.b16 %v1191, %v1190
        %v1203 = vpack.c.b16 %v1193, %v1192
        %v1204 = vpack.c.b16 %v1195, %v1194
        %v1205 = vpack.c.b16 %v1197, %v1196
        %v1207 = vsel %vm917, %v1198, 0
        %v1210 = vsel %vm917, %v1199, 0
        %v1213 = vsel %vm917, %v1200, 0
        %v1216 = vsel %vm917, %v1201, 0
        %v1219 = vsel %vm917, %v1202, 0
        %v1222 = vsel %vm917, %v1203, 0
        %v1225 = vsel %vm917, %v1204, 0
        %v1228 = vsel %vm917, %v1205, 0
        %1230 = vmatprep.subr.bf16.mxu0 %v1063
        %1231 = vmatpush1.bf16.msra.mxu0 %v1062
        %1232 = vmatprep.subr.bf16.mxu0 %v1067
        %1233 = vmatpush1.bf16.msra.mxu0 %v1066
        %1234 = vmatprep.subr.bf16.mxu0 0
        %1235 = vmatpush1.bf16.msra.mxu0 0
        %1236 = vmatprep.subr.bf16.mxu0 0
        %1237 = vmatpush1.bf16.msra.mxu0 0
        %1238 = vmatprep.subr.bf16.mxu0 0
        %1239 = vmatpush1.bf16.msra.mxu0 0
        %1240 = vmatprep.subr.bf16.mxu0 0
        %1241 = vmatpush1.bf16.msra.mxu0 0
        %1242 = vmatprep.subr.bf16.mxu0 0
        %1243 = vmatpush1.bf16.msra.mxu0 0
        %1244 = vmatprep.subr.bf16.mxu0 0
        %1245 = vmatpush1.bf16.msra.mxu0 0
        %1246 = vmatprep.subr.bf16.mxu0 0
        %1247 = vmatpush1.bf16.msra.mxu0 0
        %1248 = vmatprep.subr.bf16.mxu0 0
        %1249 = vmatpush1.bf16.msra.mxu0 0
        %1250 = vmatprep.subr.bf16.mxu0 0
        %1251 = vmatpush1.bf16.msra.mxu0 0
        %1252 = vmatprep.subr.bf16.mxu0 0
        %1253 = vmatpush1.bf16.msra.mxu0 0
        %1254 = vmatprep.subr.bf16.mxu0 0
        %1255 = vmatpush1.bf16.msra.mxu0 0
        %1256 = vmatprep.subr.bf16.mxu0 0
        %1257 = vmatpush1.bf16.msra.mxu0 0
        %1258 = vmatprep.subr.bf16.mxu0 0
        %1259 = vmatpush1.bf16.msra.mxu0 0
        %1260 = vmatprep.subr.bf16.mxu0 0
        %1261 = vmatpush1.bf16.msra.mxu0 0
        %1262 = vmatprep.mubr.bf16.mxu0 0
        %1263 = vmatmul.mubr.bf16.gmra.mrb[0].mxu0 %v1207
        %v1264 = vpop.f32.mrb[0].mxu0
        %v1265 = vadd.f32 %v1089, %v1264
        %v1266 = vpop.f32.mrb[0].mxu0
        %v1267 = vadd.f32 %v1089, %v1266
        %v1268 = vpop.f32.mrb[0].mxu0
        %v1269 = vadd.f32 %v1094, %v1268
        %v1270 = vpop.f32.mrb[0].mxu0
        %v1271 = vadd.f32 %v1094, %v1270
        %1272 = vmatprep.mubr.bf16.mxu0 0
        %1273 = vmatmul.mubr.bf16.gmra.mrb[0].mxu0 %v1210
        %v1274 = vpop.f32.mrb[0].mxu0
        %v1275 = vadd.f32 %v1099, %v1274
        %v1276 = vpop.f32.mrb[0].mxu0
        %v1277 = vadd.f32 %v1099, %v1276
        %v1278 = vpop.f32.mrb[0].mxu0
        %v1279 = vadd.f32 %v1104, %v1278
        %v1280 = vpop.f32.mrb[0].mxu0
        %v1281 = vadd.f32 %v1104, %v1280
        %1282 = vmatprep.mubr.bf16.mxu0 0
        %1283 = vmatmul.mubr.bf16.gmra.mrb[0].mxu0 %v1213
        %v1284 = vpop.f32.mrb[0].mxu0
        %v1285 = vadd.f32 %v1109, %v1284
        %v1286 = vpop.f32.mrb[0].mxu0
        %v1287 = vadd.f32 %v1109, %v1286
        %v1288 = vpop.f32.mrb[0].mxu0
        %v1289 = vadd.f32 %v1114, %v1288
        %v1290 = vpop.f32.mrb[0].mxu0
        %v1291 = vadd.f32 %v1114, %v1290
        %1292 = vmatprep.mubr.bf16.mxu0 0
        %1293 = vmatmul.mubr.bf16.gmra.mrb[0].mxu0 %v1216
        %v1294 = vpop.f32.mrb[0].mxu0
        %v1295 = vadd.f32 %v1119, %v1294
        %v1296 = vpop.f32.mrb[0].mxu0
        %v1297 = vadd.f32 %v1119, %v1296
        %v1298 = vpop.f32.mrb[0].mxu0
        %v1299 = vadd.f32 %v1124, %v1298
        %v1300 = vpop.f32.mrb[0].mxu0
        %v1301 = vadd.f32 %v1124, %v1300
        %1302 = vmatprep.mubr.bf16.mxu0 0
        %1303 = vmatmul.mubr.bf16.gmra.mrb[0].mxu0 %v1219
        %v1304 = vpop.f32.mrb[0].mxu0
        %v1305 = vadd.f32 %v1129, %v1304
        %v1306 = vpop.f32.mrb[0].mxu0
        %v1307 = vadd.f32 %v1129, %v1306
        %v1308 = vpop.f32.mrb[0].mxu0
        %v1309 = vadd.f32 %v1134, %v1308
        %v1310 = vpop.f32.mrb[0].mxu0
        %v1311 = vadd.f32 %v1134, %v1310
        %1312 = vmatprep.mubr.bf16.mxu0 0
        %1313 = vmatmul.mubr.bf16.gmra.mrb[0].mxu0 %v1222
        %v1314 = vpop.f32.mrb[0].mxu0
        %v1315 = vadd.f32 %v1139, %v1314
        %v1316 = vpop.f32.mrb[0].mxu0
        %v1317 = vadd.f32 %v1139, %v1316
        %v1318 = vpop.f32.mrb[0].mxu0
        %v1319 = vadd.f32 %v1144, %v1318
        %v1320 = vpop.f32.mrb[0].mxu0
        %v1321 = vadd.f32 %v1144, %v1320
        %1322 = vmatprep.mubr.bf16.mxu0 0
        %1323 = vmatmul.mubr.bf16.gmra.mrb[0].mxu0 %v1225
        %v1324 = vpop.f32.mrb[0].mxu0
        %v1325 = vadd.f32 %v1149, %v1324
        %v1326 = vpop.f32.mrb[0].mxu0
        %v1327 = vadd.f32 %v1149, %v1326
        %v1328 = vpop.f32.mrb[0].mxu0
        %v1329 = vadd.f32 %v1154, %v1328
        %v1330 = vpop.f32.mrb[0].mxu0
        %v1331 = vadd.f32 %v1154, %v1330
        %1332 = vmatprep.mubr.bf16.mxu0 0
        %1333 = vmatmul.mubr.bf16.gmra.mrb[0].mxu0 %v1228
        %v1334 = vpop.f32.mrb[0].mxu0
        %v1335 = vadd.f32 %v1159, %v1334
        %v1336 = vpop.f32.mrb[0].mxu0
        %v1337 = vadd.f32 %v1159, %v1336
        %v1338 = vpop.f32.mrb[0].mxu0
        %v1339 = vadd.f32 %v1164, %v1338
        %v1340 = vpop.f32.mrb[0].mxu0
        %v1341 = vadd.f32 %v1164, %v1340
        %1342 = vdwg.mxu0
        %1343 = vmatprep.subr.bf16.mxu0 %v1065
        %1344 = vmatpush1.bf16.msra.mxu0 %v1064
        %1345 = vmatprep.subr.bf16.mxu0 %v1069
        %1346 = vmatpush1.bf16.msra.mxu0 %v1068
        %1347 = vmatprep.subr.bf16.mxu0 0
        %1348 = vmatpush1.bf16.msra.mxu0 0
        %1349 = vmatprep.subr.bf16.mxu0 0
        %1350 = vmatpush1.bf16.msra.mxu0 0
        %1351 = vmatprep.subr.bf16.mxu0 0
        %1352 = vmatpush1.bf16.msra.mxu0 0
        %1353 = vmatprep.subr.bf16.mxu0 0
        %1354 = vmatpush1.bf16.msra.mxu0 0
        %1355 = vmatprep.subr.bf16.mxu0 0
        %1356 = vmatpush1.bf16.msra.mxu0 0
        %1357 = vmatprep.subr.bf16.mxu0 0
        %1358 = vmatpush1.bf16.msra.mxu0 0
        %1359 = vmatprep.subr.bf16.mxu0 0
        %1360 = vmatpush1.bf16.msra.mxu0 0
        %1361 = vmatprep.subr.bf16.mxu0 0
        %1362 = vmatpush1.bf16.msra.mxu0 0
        %1363 = vmatprep.subr.bf16.mxu0 0
        %1364 = vmatpush1.bf16.msra.mxu0 0
        %1365 = vmatprep.subr.bf16.mxu0 0
        %1366 = vmatpush1.bf16.msra.mxu0 0
        %1367 = vmatprep.subr.bf16.mxu0 0
        %1368 = vmatpush1.bf16.msra.mxu0 0
        %1369 = vmatprep.subr.bf16.mxu0 0
        %1370 = vmatpush1.bf16.msra.mxu0 0
        %1371 = vmatprep.subr.bf16.mxu0 0
        %1372 = vmatpush1.bf16.msra.mxu0 0
        %1373 = vmatprep.subr.bf16.mxu0 0
        %1374 = vmatpush1.bf16.msra.mxu0 0
        %1375 = vmatprep.mubr.bf16.mxu0 0
        %1376 = vmatmul.mubr.bf16.gmra.mrb[0].mxu0 %v1207
        %v1377 = vpop.f32.mrb[0].mxu0
        %v1378 = vadd.f32 %v1089, %v1377
        %v1379 = vpop.f32.mrb[0].mxu0
        %v1380 = vadd.f32 %v1089, %v1379
        %v1381 = vpop.f32.mrb[0].mxu0
        %v1382 = vadd.f32 %v1094, %v1381
        %v1383 = vpop.f32.mrb[0].mxu0
        %v1384 = vadd.f32 %v1094, %v1383
        %1385 = vmatprep.mubr.bf16.mxu0 0
        %1386 = vmatmul.mubr.bf16.gmra.mrb[0].mxu0 %v1210
        %v1387 = vpop.f32.mrb[0].mxu0
        %v1388 = vadd.f32 %v1099, %v1387
        %v1389 = vpop.f32.mrb[0].mxu0
        %v1390 = vadd.f32 %v1099, %v1389
        %v1391 = vpop.f32.mrb[0].mxu0
        %v1392 = vadd.f32 %v1104, %v1391
        %v1393 = vpop.f32.mrb[0].mxu0
        %v1394 = vadd.f32 %v1104, %v1393
        %1395 = vmatprep.mubr.bf16.mxu0 0
        %1396 = vmatmul.mubr.bf16.gmra.mrb[0].mxu0 %v1213
        %v1397 = vpop.f32.mrb[0].mxu0
        %v1398 = vadd.f32 %v1109, %v1397
        %v1399 = vpop.f32.mrb[0].mxu0
        %v1400 = vadd.f32 %v1109, %v1399
        %v1401 = vpop.f32.mrb[0].mxu0
        %v1402 = vadd.f32 %v1114, %v1401
        %v1403 = vpop.f32.mrb[0].mxu0
        %v1404 = vadd.f32 %v1114, %v1403
        %1405 = vmatprep.mubr.bf16.mxu0 0
        %1406 = vmatmul.mubr.bf16.gmra.mrb[0].mxu0 %v1216
        %v1407 = vpop.f32.mrb[0].mxu0
        %v1408 = vadd.f32 %v1119, %v1407
        %v1409 = vpop.f32.mrb[0].mxu0
        %v1410 = vadd.f32 %v1119, %v1409
        %v1411 = vpop.f32.mrb[0].mxu0
        %v1412 = vadd.f32 %v1124, %v1411
        %v1413 = vpop.f32.mrb[0].mxu0
        %v1414 = vadd.f32 %v1124, %v1413
        %1415 = vmatprep.mubr.bf16.mxu0 0
        %1416 = vmatmul.mubr.bf16.gmra.mrb[0].mxu0 %v1219
        %v1417 = vpop.f32.mrb[0].mxu0
        %v1418 = vadd.f32 %v1129, %v1417
        %v1419 = vpop.f32.mrb[0].mxu0
        %v1420 = vadd.f32 %v1129, %v1419
        %v1421 = vpop.f32.mrb[0].mxu0
        %v1422 = vadd.f32 %v1134, %v1421
        %v1423 = vpop.f32.mrb[0].mxu0
        %v1424 = vadd.f32 %v1134, %v1423
        %1425 = vmatprep.mubr.bf16.mxu0 0
        %1426 = vmatmul.mubr.bf16.gmra.mrb[0].mxu0 %v1222
        %v1427 = vpop.f32.mrb[0].mxu0
        %v1428 = vadd.f32 %v1139, %v1427
        %v1429 = vpop.f32.mrb[0].mxu0
        %v1430 = vadd.f32 %v1139, %v1429
        %v1431 = vpop.f32.mrb[0].mxu0
        %v1432 = vadd.f32 %v1144, %v1431
        %v1433 = vpop.f32.mrb[0].mxu0
        %v1434 = vadd.f32 %v1144, %v1433
        %1435 = vmatprep.mubr.bf16.mxu0 0
        %1436 = vmatmul.mubr.bf16.gmra.mrb[0].mxu0 %v1225
        %v1437 = vpop.f32.mrb[0].mxu0
        %v1438 = vadd.f32 %v1149, %v1437
        %v1439 = vpop.f32.mrb[0].mxu0
        %v1440 = vadd.f32 %v1149, %v1439
        %v1441 = vpop.f32.mrb[0].mxu0
        %v1442 = vadd.f32 %v1154, %v1441
        %v1443 = vpop.f32.mrb[0].mxu0
        %v1444 = vadd.f32 %v1154, %v1443
        %1445 = vmatprep.mubr.bf16.mxu0 0
        %1446 = vmatmul.mubr.bf16.gmra.mrb[0].mxu0 %v1228
        %v1447 = vpop.f32.mrb[0].mxu0
        %v1448 = vadd.f32 %v1159, %v1447
        %v1449 = vpop.f32.mrb[0].mxu0
        %v1450 = vadd.f32 %v1159, %v1449
        %v1451 = vpop.f32.mrb[0].mxu0
        %v1452 = vadd.f32 %v1164, %v1451
        %v1453 = vpop.f32.mrb[0].mxu0
        %v1454 = vadd.f32 %v1164, %v1453
        %1455 = vdwg.mxu0
        %v1456 = vld [vmem:[%s6] sm:$0xf]
        %v1457 = vld [vmem:[%s6 + $0x4] sm:$0xf]
        %v1458 = vld [vmem:[%s6 + $0x8] sm:$0xf]
        %v1459 = vld [vmem:[%s6 + $0xc] sm:$0xf]
        %v1460 = vmax.f32 %v1265, 0.0
        %v1461 = vmax.f32 %v1267, 0.0
        %v1462 = vmax.f32 %v1378, 0.0
        %v1463 = vmax.f32 %v1380, 0.0
        %v1464 = vmax.f32 %v1269, 0.0
        %v1465 = vmax.f32 %v1271, 0.0
        %v1466 = vmax.f32 %v1382, 0.0
        %v1467 = vmax.f32 %v1384, 0.0
        %v1468 = vmax.f32 %v1275, 0.0
        %v1469 = vmax.f32 %v1277, 0.0
        %v1470 = vmax.f32 %v1388, 0.0
        %v1471 = vmax.f32 %v1390, 0.0
        %v1472 = vmax.f32 %v1279, 0.0
        %v1473 = vmax.f32 %v1281, 0.0
        %v1474 = vmax.f32 %v1392, 0.0
        %v1475 = vmax.f32 %v1394, 0.0
        %v1476 = vmax.f32 %v1285, 0.0
        %v1477 = vmax.f32 %v1287, 0.0
        %v1478 = vmax.f32 %v1398, 0.0
        %v1479 = vmax.f32 %v1400, 0.0
        %v1480 = vmax.f32 %v1289, 0.0
        %v1481 = vmax.f32 %v1291, 0.0
        %v1482 = vmax.f32 %v1402, 0.0
        %v1483 = vmax.f32 %v1404, 0.0
        %v1484 = vmax.f32 %v1295, 0.0
        %v1485 = vmax.f32 %v1297, 0.0
        %v1486 = vmax.f32 %v1408, 0.0
        %v1487 = vmax.f32 %v1410, 0.0
        %v1488 = vmax.f32 %v1299, 0.0
        %v1489 = vmax.f32 %v1301, 0.0
        %v1490 = vmax.f32 %v1412, 0.0
        %v1491 = vmax.f32 %v1414, 0.0
        %v1492 = vmax.f32 %v1305, 0.0
        %v1493 = vmax.f32 %v1307, 0.0
        %v1494 = vmax.f32 %v1418, 0.0
        %v1495 = vmax.f32 %v1420, 0.0
        %v1496 = vmax.f32 %v1309, 0.0
        %v1497 = vmax.f32 %v1311, 0.0
        %v1498 = vmax.f32 %v1422, 0.0
        %v1499 = vmax.f32 %v1424, 0.0
        %v1500 = vmax.f32 %v1315, 0.0
        %v1501 = vmax.f32 %v1317, 0.0
        %v1502 = vmax.f32 %v1428, 0.0
        %v1503 = vmax.f32 %v1430, 0.0
        %v1504 = vmax.f32 %v1319, 0.0
        %v1505 = vmax.f32 %v1321, 0.0
        %v1506 = vmax.f32 %v1432, 0.0
        %v1507 = vmax.f32 %v1434, 0.0
        %v1508 = vmax.f32 %v1325, 0.0
        %v1509 = vmax.f32 %v1327, 0.0
        %v1510 = vmax.f32 %v1438, 0.0
        %v1511 = vmax.f32 %v1440, 0.0
        %v1512 = vmax.f32 %v1329, 0.0
        %v1513 = vmax.f32 %v1331, 0.0
        %v1514 = vmax.f32 %v1442, 0.0
        %v1515 = vmax.f32 %v1444, 0.0
        %v1516 = vmax.f32 %v1335, 0.0
        %v1517 = vmax.f32 %v1337, 0.0
        %v1518 = vmax.f32 %v1448, 0.0
        %v1519 = vmax.f32 %v1450, 0.0
        %v1520 = vmax.f32 %v1339, 0.0
        %v1521 = vmax.f32 %v1341, 0.0
        %v1522 = vmax.f32 %v1452, 0.0
        %v1523 = vmax.f32 %v1454, 0.0
        %v1524 = vpack.c.bf16 %v1464, %v1460
        %v1525 = vpack.c.bf16 %v1465, %v1461
        %v1526 = vpack.c.bf16 %v1466, %v1462
        %v1527 = vpack.c.bf16 %v1467, %v1463
        %v1528 = vpack.c.bf16 %v1472, %v1468
        %v1529 = vpack.c.bf16 %v1473, %v1469
        %v1530 = vpack.c.bf16 %v1474, %v1470
        %v1531 = vpack.c.bf16 %v1475, %v1471
        %v1532 = vpack.c.bf16 %v1480, %v1476
        %v1533 = vpack.c.bf16 %v1481, %v1477
        %v1534 = vpack.c.bf16 %v1482, %v1478
        %v1535 = vpack.c.bf16 %v1483, %v1479
        %v1536 = vpack.c.bf16 %v1488, %v1484
        %v1537 = vpack.c.bf16 %v1489, %v1485
        %v1538 = vpack.c.bf16 %v1490, %v1486
        %v1539 = vpack.c.bf16 %v1491, %v1487
        %v1540 = vpack.c.bf16 %v1496, %v1492
        %v1541 = vpack.c.bf16 %v1497, %v1493
        %v1542 = vpack.c.bf16 %v1498, %v1494
        %v1543 = vpack.c.bf16 %v1499, %v1495
        %v1544 = vpack.c.bf16 %v1504, %v1500
        %v1545 = vpack.c.bf16 %v1505, %v1501
        %v1546 = vpack.c.bf16 %v1506, %v1502
        %v1547 = vpack.c.bf16 %v1507, %v1503
        %v1548 = vpack.c.bf16 %v1512, %v1508
        %v1549 = vpack.c.bf16 %v1513, %v1509
        %v1550 = vpack.c.bf16 %v1514, %v1510
        %v1551 = vpack.c.bf16 %v1515, %v1511
        %v1552 = vpack.c.bf16 %v1520, %v1516
        %v1553 = vpack.c.bf16 %v1521, %v1517
        %v1554 = vpack.c.bf16 %v1522, %v1518
        %v1555 = vpack.c.bf16 %v1523, %v1519
        %v1556 = vld [vmem:[%s7 + $0xc0] sm:$0xff]
        %v1557 = vld [vmem:[%s7 + $0xc8] sm:$0xff]
        %v1558 = vld [vmem:[%s7 + $0xd0] sm:$0xff]
        %v1559 = vld [vmem:[%s7 + $0xd8] sm:$0xff]
        %1561 = vset.pattern.permute.xlu0 0
        %1562 = vperm.xlu0 %1561, %v1556
        %v1563 = vpop.permute.xlu0 %1562
        %1566 = vset.pattern.permute.xlu0 0
        %1567 = vperm.xlu0 %1566, %v1557
        %v1568 = vpop.permute.xlu0 %1567
        %1571 = vset.pattern.permute.xlu0 0
        %1572 = vperm.xlu0 %1571, %v1558
        %v1573 = vpop.permute.xlu0 %1572
        %1576 = vset.pattern.permute.xlu0 0
        %1577 = vperm.xlu0 %1576, %v1559
        %v1578 = vpop.permute.xlu0 %1577
        %v1584 = vunpack.c.l.b16 %v1456
        %v1585 = vunpack.c.l.b16 %v1457
        %v1586 = vunpack.c.l.b16 %v1458
        %v1587 = vunpack.c.l.b16 %v1459
        %v1588 = vpack.c.b16 %v1585, %v1584
        %v1589 = vpack.c.b16 %v1587, %v1586
        %1592 = vmatprep.subr.bf16.mxu0 %v1525
        %1593 = vmatpush1.bf16.msra.mxu0 %v1524
        %1594 = vmatprep.subr.bf16.mxu0 %v1529
        %1595 = vmatpush1.bf16.msra.mxu0 %v1528
        %1596 = vmatprep.subr.bf16.mxu0 %v1533
        %1597 = vmatpush1.bf16.msra.mxu0 %v1532
        %1598 = vmatprep.subr.bf16.mxu0 %v1537
        %1599 = vmatpush1.bf16.msra.mxu0 %v1536
        %1600 = vmatprep.subr.bf16.mxu0 %v1541
        %1601 = vmatpush1.bf16.msra.mxu0 %v1540
        %1602 = vmatprep.subr.bf16.mxu0 %v1545
        %1603 = vmatpush1.bf16.msra.mxu0 %v1544
        %1604 = vmatprep.subr.bf16.mxu0 %v1549
        %1605 = vmatpush1.bf16.msra.mxu0 %v1548
        %1606 = vmatprep.subr.bf16.mxu0 %v1553
        %1607 = vmatpush1.bf16.msra.mxu0 %v1552
        %1608 = vmatprep.subr.bf16.mxu0 0
        %1609 = vmatpush1.bf16.msra.mxu0 0
        %1610 = vmatprep.subr.bf16.mxu0 0
        %1611 = vmatpush1.bf16.msra.mxu0 0
        %1612 = vmatprep.subr.bf16.mxu0 0
        %1613 = vmatpush1.bf16.msra.mxu0 0
        %1614 = vmatprep.subr.bf16.mxu0 0
        %1615 = vmatpush1.bf16.msra.mxu0 0
        %1616 = vmatprep.subr.bf16.mxu0 0
        %1617 = vmatpush1.bf16.msra.mxu0 0
        %1618 = vmatprep.subr.bf16.mxu0 0
        %1619 = vmatpush1.bf16.msra.mxu0 0
        %1620 = vmatprep.subr.bf16.mxu0 0
        %1621 = vmatpush1.bf16.msra.mxu0 0
        %1622 = vmatprep.subr.bf16.mxu0 0
        %1623 = vmatpush1.bf16.msra.mxu0 0
        %1624 = vmatprep.mubr.bf16.mxu0 0
        %1625 = vmatmul.mubr.bf16.gmra.mrb[0].mxu0 %v1588
        %v1626 = vpop.f32.mrb[0].mxu0
        %v1627 = vadd.f32 %v1563, %v1626
        %v1628 = vpop.f32.mrb[0].mxu0
        %v1629 = vadd.f32 %v1563, %v1628
        %v1630 = vpop.f32.mrb[0].mxu0
        %v1631 = vadd.f32 %v1568, %v1630
        %v1632 = vpop.f32.mrb[0].mxu0
        %v1633 = vadd.f32 %v1568, %v1632
        %1634 = vmatprep.mubr.bf16.mxu0 0
        %1635 = vmatmul.mubr.bf16.gmra.mrb[0].mxu0 %v1589
        %v1636 = vpop.f32.mrb[0].mxu0
        %v1637 = vadd.f32 %v1573, %v1636
        %v1638 = vpop.f32.mrb[0].mxu0
        %v1639 = vadd.f32 %v1573, %v1638
        %v1640 = vpop.f32.mrb[0].mxu0
        %v1641 = vadd.f32 %v1578, %v1640
        %v1642 = vpop.f32.mrb[0].mxu0
        %v1643 = vadd.f32 %v1578, %v1642
        %1644 = vdwg.mxu0
        %1645 = vmatprep.subr.bf16.mxu0 %v1527
        %1646 = vmatpush1.bf16.msra.mxu0 %v1526
        %1647 = vmatprep.subr.bf16.mxu0 %v1531
        %1648 = vmatpush1.bf16.msra.mxu0 %v1530
        %1649 = vmatprep.subr.bf16.mxu0 %v1535
        %1650 = vmatpush1.bf16.msra.mxu0 %v1534
        %1651 = vmatprep.subr.bf16.mxu0 %v1539
        %1652 = vmatpush1.bf16.msra.mxu0 %v1538
        %1653 = vmatprep.subr.bf16.mxu0 %v1543
        %1654 = vmatpush1.bf16.msra.mxu0 %v1542
        %1655 = vmatprep.subr.bf16.mxu0 %v1547
        %1656 = vmatpush1.bf16.msra.mxu0 %v1546
        %1657 = vmatprep.subr.bf16.mxu0 %v1551
        %1658 = vmatpush1.bf16.msra.mxu0 %v1550
        %1659 = vmatprep.subr.bf16.mxu0 %v1555
        %1660 = vmatpush1.bf16.msra.mxu0 %v1554
        %1661 = vmatprep.subr.bf16.mxu0 0
        %1662 = vmatpush1.bf16.msra.mxu0 0
        %1663 = vmatprep.subr.bf16.mxu0 0
        %1664 = vmatpush1.bf16.msra.mxu0 0
        %1665 = vmatprep.subr.bf16.mxu0 0
        %1666 = vmatpush1.bf16.msra.mxu0 0
        %1667 = vmatprep.subr.bf16.mxu0 0
        %1668 = vmatpush1.bf16.msra.mxu0 0
        %1669 = vmatprep.subr.bf16.mxu0 0
        %1670 = vmatpush1.bf16.msra.mxu0 0
        %1671 = vmatprep.subr.bf16.mxu0 0
        %1672 = vmatpush1.bf16.msra.mxu0 0
        %1673 = vmatprep.subr.bf16.mxu0 0
        %1674 = vmatpush1.bf16.msra.mxu0 0
        %1675 = vmatprep.subr.bf16.mxu0 0
        %1676 = vmatpush1.bf16.msra.mxu0 0
        %1677 = vmatprep.mubr.bf16.mxu0 0
        %1678 = vmatmul.mubr.bf16.gmra.mrb[0].mxu0 %v1588
        %v1679 = vpop.f32.mrb[0].mxu0
        %v1680 = vadd.f32 %v1563, %v1679
        %v1681 = vpop.f32.mrb[0].mxu0
        %v1682 = vadd.f32 %v1563, %v1681
        %v1683 = vpop.f32.mrb[0].mxu0
        %v1684 = vadd.f32 %v1568, %v1683
        %v1685 = vpop.f32.mrb[0].mxu0
        %v1686 = vadd.f32 %v1568, %v1685
        %1687 = vmatprep.mubr.bf16.mxu0 0
        %1688 = vmatmul.mubr.bf16.gmra.mrb[0].mxu0 %v1589
        %v1689 = vpop.f32.mrb[0].mxu0
        %v1690 = vadd.f32 %v1573, %v1689
        %v1691 = vpop.f32.mrb[0].mxu0
        %v1692 = vadd.f32 %v1573, %v1691
        %v1693 = vpop.f32.mrb[0].mxu0
        %v1694 = vadd.f32 %v1578, %v1693
        %v1695 = vpop.f32.mrb[0].mxu0
        %v1696 = vadd.f32 %v1578, %v1695
        %1697 = vdwg.mxu0
        %v1702 = vcombine.low %v1627, %v1629
        %v1703 = vcombine.low %v1680, %v1682
        %v1706 = vadd.f32 %v483, %v1702
        %v1707 = vadd.f32 %v484, %v1703
        %1708 = vst [vmem:[%s433] sm:$0x77] %v1706
        %1709 = vst [vmem:[%s433 + $0x8] sm:$0x77] %v1707
        %v1710 = vld [vmem:[%s465] sm:$0x77]
        %v1711 = vld [vmem:[%s465 + $0x8] sm:$0x77]
        %v1716 = vcombine.low %v1631, %v1633
        %v1717 = vcombine.low %v1684, %v1686
        %v1720 = vadd.f32 %v1710, %v1716
        %v1721 = vadd.f32 %v1711, %v1717
        %1722 = vst [vmem:[%s440] sm:$0x77] %v1720
        %1723 = vst [vmem:[%s440 + $0x8] sm:$0x77] %v1721
        %v1724 = vld [vmem:[%s471] sm:$0xff]
        %v1725 = vld [vmem:[%s471 + $0x8] sm:$0xff]
        %v1730 = vcombine.low %v1637, %v1639
        %v1731 = vcombine.low %v1690, %v1692
        %v1734 = vadd.f32 %v1724, %v1730
        %v1735 = vadd.f32 %v1725, %v1731
        %1736 = vst [vmem:[%s447] sm:$0xff] %v1734
        %1737 = vst [vmem:[%s447 + $0x8] sm:$0xff] %v1735
        %v1738 = vld [vmem:[%s476] sm:$0xf]
        %v1743 = vcombine.low %v1641, %v1643
        %v1744 = vcombine.low %v1694, %v1696
        %v1746 = vunpack.c.l.s4 1966171168
        %v1747 = vunpack.c.0.s8 %v1746
        %v1748 = vlaneseq
        %v1749 = vshrl.u32 %v1748, 7
        %v1750 = vsub.s32 %v1747, %v1749
        %v1751 = vrot.slane %v1743, %v1750
        %v1753 = vunpack.c.l.s4 1966171168
        %v1754 = vunpack.c.0.s8 %v1753
        %v1755 = vlaneseq
        %v1756 = vshrl.u32 %v1755, 7
        %v1757 = vsub.s32 %v1754, %v1756
        %v1758 = vrot.slane %v1744, %v1757
        %v1759 = vcombine.low %v1751, %v1758
        %v1761 = vunpack.c.l.s4 1966171168
        %v1762 = vunpack.c.0.s8 %v1761
        %v1763 = vlaneseq
        %v1764 = vshrl.u32 %v1763, 7
        %v1765 = vsub.s32 %v1762, %v1764
        %v1766 = vrot.slane %v1759, %v1765
        %v1768 = vadd.f32 %v1738, %v1766
        %v1769 = vlaneseq
        %vm1770 = vcmp.ge.s32.totalorder %v1769, 0
        %vm1771 = vcmp.lt.s32.totalorder %v1769, 512
        %vm1772 = vmand %vm1770, %vm1771
        %1773 = vst.msk [vmem:[%s454] sm:$0xf] %vm1772, %v1768
        %s1774 = sand.u32 %s228, 1
        %s1775 = scalar_lea.sflag [#allocation3], %s1774
        %s1776 = sand.u32 %s228, 1
        %s1777 = smul.addr %s1776, 16
        %s1778 = scalar_lea.vmem [#allocation2], %s1777
        %s1779 = sand.u32 %s32, 1
        %s1780 = scalar_lea.sflag [#allocation5], %s1779
        %s1781 = sand.u32 %s254, 1
        %s1782 = smul.addr %s1781, 16
        %s1783 = scalar_lea.vmem [#allocation4], %s1782
        %s1784 = sand.u32 %s32, 1
        %s1785 = scalar_lea.sflag [#allocation5], %s1784
        %s1786 = sand.u32 %s280, 1
        %s1787 = smul.addr %s1786, 16
        %s1788 = scalar_lea.vmem [#allocation6], %s1787
        %s1789 = sand.u32 %s306, 1
        %s1790 = scalar_lea.sflag [#allocation8], %s1789
        %s1791 = sand.u32 %s306, 1
        %s1792 = smul.addr %s1791, 4
        %s1793 = scalar_lea.vmem [#allocation7], %s1792
        // Predicated region
        $region53: #{deform_network_gaussian_forward.1} parent=51 // pred_check
          %p1794 = pneg %p238
        $region54: #{deform_network_gaussian_forward.1} parent=51 // pred_check_branch
          %1796 = sbr.rel (%p1794) target = $region56
        $region55: #{deform_network_gaussian_forward.1} parent=51 // pred_region
          %s1797 = smul.u32 4, %s32
          %s1799 = ssub.s32 256, 256
          %1800 = vsyncadd %s1775, %s1799
          %s1801 = smul.addr %s1797, 64
          %s1802 = scalar_lea.hbm %s8, %s1801
          %s1804 = sshll.u32 %s1778, 4
          %s1805 = int_to_ptr.vmem [resolvable:$true] %s1804
          %1807 = dma.vmem_to_hbm [thread:$0]  %s1805, 256, %s1802, %s1775
        $region56: #{deform_network_gaussian_forward.1} parent=51 // pred_fallthru
          _
        // Predicated region
        $region57: #{deform_network_gaussian_forward.1} parent=51 // pred_check
          %p1808 = pneg %p264
        $region58: #{deform_network_gaussian_forward.1} parent=51 // pred_check_branch
          %1810 = sbr.rel (%p1808) target = $region60
        $region59: #{deform_network_gaussian_forward.1} parent=51 // pred_region
          %s1811 = smul.u32 4, %s32
          %s1813 = ssub.s32 256, 256
          %1814 = vsyncadd %s1780, %s1813
          %s1815 = smul.addr %s1811, 64
          %s1816 = scalar_lea.hbm %s9, %s1815
          %s1818 = sshll.u32 %s1783, 4
          %s1819 = int_to_ptr.vmem [resolvable:$true] %s1818
          %1821 = dma.vmem_to_hbm [thread:$0]  %s1819, 256, %s1816, %s1780
        $region60: #{deform_network_gaussian_forward.1} parent=51 // pred_fallthru
          _
        // Predicated region
        $region61: #{deform_network_gaussian_forward.1} parent=51 // pred_check
          %p1822 = pneg %p290
        $region62: #{deform_network_gaussian_forward.1} parent=51 // pred_check_branch
          %1824 = sbr.rel (%p1822) target = $region64
        $region63: #{deform_network_gaussian_forward.1} parent=51 // pred_region
          %s1825 = smul.u32 4, %s32
          %s1827 = ssub.s32 256, 256
          %1828 = vsyncadd %s1785, %s1827
          %s1829 = smul.addr %s1825, 64
          %s1830 = scalar_lea.hbm %s10, %s1829
          %s1832 = sshll.u32 %s1788, 4
          %s1833 = int_to_ptr.vmem [resolvable:$true] %s1832
          %1835 = dma.vmem_to_hbm [thread:$0]  %s1833, 256, %s1830, %s1785
        $region64: #{deform_network_gaussian_forward.1} parent=51 // pred_fallthru
          _
        // Predicated region
        $region65: #{deform_network_gaussian_forward.1} parent=51 // pred_check
          %p1836 = pneg %p316
        $region66: #{deform_network_gaussian_forward.1} parent=51 // pred_check_branch
          %1838 = sbr.rel (%p1836) target = $region68
        $region67: #{deform_network_gaussian_forward.1} parent=51 // pred_region
          %s1839 = smul.u32 4, %s32
          %s1841 = ssub.s32 64, 64
          %1842 = vsyncadd %s1790, %s1841
          %s1843 = smul.addr %s1839, 16
          %s1844 = scalar_lea.hbm %s11, %s1843
          %s1846 = sshll.u32 %s1793, 4
          %s1847 = int_to_ptr.vmem [resolvable:$true] %s1846
          %1849 = dma.vmem_to_hbm [thread:$0]  %s1847, 64, %s1844, %s1790
        $region68: #{deform_network_gaussian_forward.1} parent=51 // pred_fallthru
          _
      $region52: #{deform_network_gaussian_forward.1} parent=5 // pred_fallthru
        _
      %p1850 = scmp.le.s32.totalorder 2, %s27
      // Predicated region
      $region69: #{deform_network_gaussian_forward.1} parent=5 // pred_check
        %p1851 = pneg %p1850
      $region70: #{deform_network_gaussian_forward.1} parent=5 // pred_check_branch
        %1853 = sbr.rel (%p1851) target = $region72
      $region71: #{deform_network_gaussian_forward.1} parent=5 // pred_region
        %s1854 = ssub.s32 %s27, 2
        // Predicated region
        $region73: #{deform_network_gaussian_forward.1} parent=71 // pred_check
          %p1855 = pneg %p244
        $region74: #{deform_network_gaussian_forward.1} parent=71 // pred_check_branch
          %1857 = sbr.rel (%p1855) target = $region76
        $region75: #{deform_network_gaussian_forward.1} parent=71 // pred_region
          %s1858 = sand.u32 %s229, 1
          %s1859 = scalar_lea.sflag [#allocation3], %s1858
          %s1860 = sand.u32 %s229, 1
          %s1861 = smul.addr %s1860, 16
          %s1862 = scalar_lea.vmem [#allocation2], %s1861
          %1863 = dma.done %s1859, 256
        $region76: #{deform_network_gaussian_forward.1} parent=71 // pred_fallthru
          _
        // Predicated region
        $region77: #{deform_network_gaussian_forward.1} parent=71 // pred_check
          %p1864 = pneg %p270
        $region78: #{deform_network_gaussian_forward.1} parent=71 // pred_check_branch
          %1866 = sbr.rel (%p1864) target = $region80
        $region79: #{deform_network_gaussian_forward.1} parent=71 // pred_region
          %s1867 = sand.u32 %s33, 1
          %s1868 = scalar_lea.sflag [#allocation5], %s1867
          %s1869 = sand.u32 %s255, 1
          %s1870 = smul.addr %s1869, 16
          %s1871 = scalar_lea.vmem [#allocation4], %s1870
          %1872 = dma.done %s1868, 256
        $region80: #{deform_network_gaussian_forward.1} parent=71 // pred_fallthru
          _
        // Predicated region
        $region81: #{deform_network_gaussian_forward.1} parent=71 // pred_check
          %p1873 = pneg %p296
        $region82: #{deform_network_gaussian_forward.1} parent=71 // pred_check_branch
          %1875 = sbr.rel (%p1873) target = $region84
        $region83: #{deform_network_gaussian_forward.1} parent=71 // pred_region
          %s1876 = sand.u32 %s33, 1
          %s1877 = scalar_lea.sflag [#allocation5], %s1876
          %s1878 = sand.u32 %s281, 1
          %s1879 = smul.addr %s1878, 16
          %s1880 = scalar_lea.vmem [#allocation6], %s1879
          %1881 = dma.done %s1877, 256
        $region84: #{deform_network_gaussian_forward.1} parent=71 // pred_fallthru
          _
        // Predicated region
        $region85: #{deform_network_gaussian_forward.1} parent=71 // pred_check
          %p1882 = pneg %p322
        $region86: #{deform_network_gaussian_forward.1} parent=71 // pred_check_branch
          %1884 = sbr.rel (%p1882) target = $region88
        $region87: #{deform_network_gaussian_forward.1} parent=71 // pred_region
          %s1885 = sand.u32 %s307, 1
          %s1886 = scalar_lea.sflag [#allocation8], %s1885
          %s1887 = sand.u32 %s307, 1
          %s1888 = smul.addr %s1887, 4
          %s1889 = scalar_lea.vmem [#allocation7], %s1888
          %1890 = dma.done %s1886, 64
        $region88: #{deform_network_gaussian_forward.1} parent=71 // pred_fallthru
          _
      $region72: #{deform_network_gaussian_forward.1} parent=5 // pred_fallthru
        _
    $region6: #{deform_network_gaussian_forward.1} parent=1 // loop_footer
      %s31 = sadd.s32 1, %s27
    $region7: #{deform_network_gaussian_forward.1} parent=1 // loop_footer_branch
      %26 = sbr.rel target = $region3
    $region8: #{deform_network_gaussian_forward.1} parent=1 // loop_exit
      _
    %1891 = vsyncpa [#allocation3], 1
    %s1892 = scalar_lea.sflag [#allocation3], 1
    %1893 = vsyncpa %s1892, 1
    %1894 = vsyncpa [#allocation5], 1
    %s1895 = scalar_lea.sflag [#allocation5], 1
    %1896 = vsyncpa %s1895, 1
    %1897 = vsyncpa [#allocation8], 1
    %s1898 = scalar_lea.sflag [#allocation8], 1
    %1899 = vsyncpa %s1898, 1

</llo_original>
